<compile_context>
chip_gen: v7x
topology: tpu7x:2x2x1
jax: 0.10.0
libtpu: 0.0.40
codegen_flags: <defaults>
</compile_context>

<pallas_src>
import jax
import jax.numpy as jnp
from jax.experimental import pallas as pl
from jax.experimental.pallas import tpu as pltpu

HIDDEN = 32            # hidden_size
VOCAB = 64             # output_size (target vocabulary)
LANE = 128             # TPU lane width
assert 4 * HIDDEN <= LANE and 2 * HIDDEN <= LANE


def decoder_rnn_kernel(tokens_ref,                        # (T,) int32 in SMEM (scalar prefetch)
                       emb_ref, h0_ref, c0_ref,           # VMEM-resident inputs
                       w_ref, b_ref, wout_ref, bout_ref,  # fused/padded weights (resident)
                       logits_ref, state_ref):            # outputs
    T = logits_ref.shape[0]
    lane = jax.lax.broadcasted_iota(jnp.int32, (1, LANE), 1)   # hoisted out of the loop
    h_lanes = lane < HIDDEN                                     # lanes [0, HIDDEN) carry h / c

    def step(t, carry):
        h, c = carry
        tok = tokens_ref[t]                                     # scalar read from SMEM
        # Fused embedding gather + ReLU.  The packed table holds the embedding in
        # lanes [HIDDEN, 2*HIDDEN); relu(0)=0 keeps every other lane zero.
        x = jnp.maximum(emb_ref[pl.ds(tok, 1), :], 0.0)         # (1, 128)

        # Single fused MXU push: input lanes [0,H) = h, [H,2H) = relu(emb(tok));
        # combined weight has W_hh in rows [0,H), W_ih in rows [H,2H), zeros below.
        xin = jnp.where(h_lanes, h, x)                          # (1, 128), no lane shuffle
        gates = (jnp.dot(xin, w_ref[...], preferred_element_type=jnp.float32)
                 + b_ref[...])                                  # (1, 128): [i|f|g|o] x 32 lanes

        # Two EUP tanh ops cover all four activations (sigmoid(x)=0.5*(1+tanh(x/2)));
        # XLU rolls align each gate's 32 lanes with the h/c lanes [0, HIDDEN).
        sig_all = 0.5 * (jnp.tanh(0.5 * gates) + 1.0)
        tanh_all = jnp.tanh(gates)
        i_g = sig_all                                           # lanes [0,32) = i
        f_g = pltpu.roll(sig_all, shift=LANE - HIDDEN, axis=1)      # f -> lanes [0,32)
        g_g = pltpu.roll(tanh_all, shift=LANE - 2 * HIDDEN, axis=1)  # g -> lanes [0,32)
        o_g = pltpu.roll(sig_all, shift=LANE - 3 * HIDDEN, axis=1)   # o -> lanes [0,32)

        c_new = f_g * c + i_g * g_g                             # valid in lanes [0,32)
        h_new = o_g * jnp.tanh(c_new)                           # pad lanes never reach outputs:
                                                                # W_out/W_comb pad rows are zero
        # Lane-dense output projection, written to the resident (T,128) buffer.
        logits = (jnp.dot(h_new, wout_ref[...], preferred_element_type=jnp.float32)
                  + bout_ref[...])                              # (1, 128)
        logits_ref[pl.ds(t, 1), :] = logits
        return h_new, c_new

    h_fin, c_fin = jax.lax.fori_loop(0, T, step, (h0_ref[...], c0_ref[...]),
                                     unroll=True)
    state_ref[0:1, :] = jnp.where(h_lanes, h_fin, 0.0)
    state_ref[1:2, :] = jnp.where(h_lanes, c_fin, 0.0)


def init_params(key, hidden_size=HIDDEN, output_size=VOCAB):
    """Raw parameters in PyTorch layout (validates packing against torch semantics)."""
    ks = jax.random.split(key, 7)
    s = 1.0 / jnp.sqrt(hidden_size)
    return {
        "embedding": jax.random.normal(ks[0], (output_size, hidden_size), jnp.float32),
        "weight_ih": jax.random.uniform(ks[1], (4 * hidden_size, hidden_size),
                                        jnp.float32, -s, s),
        "weight_hh": jax.random.uniform(ks[2], (4 * hidden_size, hidden_size),
                                        jnp.float32, -s, s),
        "bias_ih": jax.random.uniform(ks[3], (4 * hidden_size,), jnp.float32, -s, s),
        "bias_hh": jax.random.uniform(ks[4], (4 * hidden_size,), jnp.float32, -s, s),
        "weight_out": jax.random.uniform(ks[5], (output_size, hidden_size),
                                         jnp.float32, -s, s),
        "bias_out": jax.random.uniform(ks[6], (output_size,), jnp.float32, -s, s),
    }


def pack_params(raw):
    """PyTorch-layout params -> fused, padded, pre-transposed kernel layout.

    Invariant (correctness of pad lanes): every pad row/column of the packed
    weights and biases is exactly zero, so stray pad-lane values in h/c never
    reach the gates, the logits, or the recurrent state's valid lanes.
    """
    H, V = HIDDEN, VOCAB
    # Embedding shifted into lanes [H, 2H) so relu(row) composes with h by a VPU select.
    emb_pad = jnp.zeros((V, LANE), jnp.float32).at[:, H:2 * H].set(raw["embedding"])

    # Combined gate weight: rows [0,H) = W_hh^T, rows [H,2H) = W_ih^T, per-gate columns.
    w_comb = jnp.zeros((LANE, LANE), jnp.float32)
    b_comb = jnp.zeros((1, LANE), jnp.float32)
    b_fused = raw["bias_ih"] + raw["bias_hh"]
    for g in range(4):                                   # gate order [i, f, g, o]
        col = g * H
        w_comb = w_comb.at[0:H, col:col + H].set(raw["weight_hh"][g * H:(g + 1) * H, :].T)
        w_comb = w_comb.at[H:2 * H, col:col + H].set(raw["weight_ih"][g * H:(g + 1) * H, :].T)
        b_comb = b_comb.at[0, col:col + H].set(b_fused[g * H:(g + 1) * H])

    w_out_pad = jnp.zeros((LANE, LANE), jnp.float32).at[:H, :V].set(raw["weight_out"].T)
    b_out_pad = jnp.zeros((1, LANE), jnp.float32).at[0, :V].set(raw["bias_out"])
    return {"emb": emb_pad, "w": w_comb, "b": b_comb,
            "w_out": w_out_pad, "b_out": b_out_pad}


def decoder_rnn_decode(packed, tokens, prev_state):
    """Run all T decode steps inside ONE pallas_call / ONE kernel invocation.
    tokens: (T,) int32 (must be < VOCAB; not bounds-checked in-kernel).
    prev_state: (h, c), each (1, 1, HIDDEN)."""
    T = int(tokens.shape[0])
    h0, c0 = prev_state
    h0p = jnp.zeros((1, LANE), jnp.float32).at[:, :HIDDEN].set(h0.reshape(1, HIDDEN))
    c0p = jnp.zeros((1, LANE), jnp.float32).at[:, :HIDDEN].set(c0.reshape(1, HIDDEN))

    const = lambda i, tok: (0, 0)
    grid_spec = pltpu.PrefetchScalarGridSpec(
        num_scalar_prefetch=1,
        grid=(1,),                                       # single invocation; loop is in-kernel
        in_specs=[
            pl.BlockSpec((VOCAB, LANE), const),          # embedding table (shifted, resident)
            pl.BlockSpec((1, LANE), const),              # h0 (padded)
            pl.BlockSpec((1, LANE), const),              # c0 (padded)
            pl.BlockSpec((LANE, LANE), const),           # fused W_hh|W_ih (resident)
            pl.BlockSpec((1, LANE), const),              # fused gate bias
            pl.BlockSpec((LANE, LANE), const),           # W_out (padded, resident)
            pl.BlockSpec((1, LANE), const),              # b_out (padded)
        ],
        out_specs=(
            pl.BlockSpec((T, LANE), const),              # all logits, resident, lane-dense
            pl.BlockSpec((2, LANE), const),              # final (h, c), padded to 128 lanes
        ),
    )

    logits_pad, state = pl.pallas_call(
        decoder_rnn_kernel,
        grid_spec=grid_spec,
        out_shape=(
            jax.ShapeDtypeStruct((T, LANE), jnp.float32),
            jax.ShapeDtypeStruct((2, LANE), jnp.float32),
        ),
        compiler_params=pltpu.CompilerParams(dimension_semantics=("arbitrary",)),
    )(tokens.astype(jnp.int32), packed["emb"], h0p, c0p,
      packed["w"], packed["b"], packed["w_out"], packed["b_out"])

    logits = logits_pad[:, :VOCAB].reshape(T, 1, 1, VOCAB)
    h_new = state[0:1, :HIDDEN].reshape(1, 1, HIDDEN)
    c_new = state[1:2, :HIDDEN].reshape(1, 1, HIDDEN)
    return logits, (h_new, c_new)


def decoder_rnn_forward(packed, token, prev_state):
    """Single-step forward matching the PyTorch module: returns ((1,1,V), (h, c))."""
    tokens = jnp.asarray(token, jnp.int32).reshape(1)
    logits, state = decoder_rnn_decode(packed, tokens, prev_state)
    return logits[0], state


def _reference_decode(raw, tokens, prev_state):
    """Pure-JAX step-by-step reference using the RAW PyTorch-layout weights."""
    h0, c0 = prev_state
    h = h0.reshape(1, HIDDEN)
    c = c0.reshape(1, HIDDEN)
    outs = []
    for ti in range(tokens.shape[0]):
        x = jnp.maximum(raw["embedding"][tokens[ti]].reshape(1, HIDDEN), 0.0)
        gates = (x @ raw["weight_ih"].T + raw["bias_ih"]
                 + h @ raw["weight_hh"].T + raw["bias_hh"])
        i_g = jax.nn.sigmoid(gates[:, 0:HIDDEN])
        f_g = jax.nn.sigmoid(gates[:, HIDDEN:2 * HIDDEN])
        g_g = jnp.tanh(gates[:, 2 * HIDDEN:3 * HIDDEN])
        o_g = jax.nn.sigmoid(gates[:, 3 * HIDDEN:4 * HIDDEN])
        c = f_g * c + i_g * g_g
        h = o_g * jnp.tanh(c)
        outs.append((h @ raw["weight_out"].T + raw["bias_out"]).reshape(1, 1, VOCAB))
    logits = jnp.stack(outs, axis=0)  # (T, 1, 1, V)
    return logits, (h.reshape(1, 1, HIDDEN), c.reshape(1, 1, HIDDEN))


if __name__ == "__main__":
    key = jax.random.PRNGKey(0)
    pkey, tkey = jax.random.split(key)
    raw = init_params(pkey)
    packed = pack_params(raw)

    T = 8
    tokens = jax.random.randint(tkey, (T,), 0, VOCAB, dtype=jnp.int32)
    h0 = jnp.zeros((1, 1, HIDDEN), jnp.float32)
    c0 = jnp.zeros((1, 1, HIDDEN), jnp.float32)

    # Full-sequence decode: one pallas_call, one kernel invocation, state in vregs.
    logits, (h_new, c_new) = decoder_rnn_decode(packed, tokens, (h0, c0))
    jax.block_until_ready((logits, h_new, c_new))

    ref_logits, (ref_h, ref_c) = _reference_decode(raw, tokens, (h0, c0))
    assert logits.shape == (T, 1, 1, VOCAB)
    assert h_new.shape == (1, 1, HIDDEN) and c_new.shape == (1, 1, HIDDEN)
    assert jnp.allclose(logits, ref_logits, rtol=1e-3, atol=1e-3)
    assert jnp.allclose(h_new, ref_h, rtol=1e-3, atol=1e-3)
    assert jnp.allclose(c_new, ref_c, rtol=1e-3, atol=1e-3)

    # Single-step forward (exact PyTorch forward signature/shapes).
    step_logits, (sh, sc) = decoder_rnn_forward(packed, tokens[0], (h0, c0))
    jax.block_until_ready((step_logits, sh, sc))
    assert step_logits.shape == (1, 1, VOCAB)
    assert jnp.allclose(step_logits, ref_logits[0], rtol=1e-3, atol=1e-3)

    print("KERNEL_OK")
</pallas_src>

<mosaic_0001>
module attributes {stable_mosaic.version = 11 : i64} {
  func.func @decoder_rnn_kernel(%arg0: i32, %arg1: memref<8xi32, #tpu.memory_space<smem>>, %arg2: memref<64x128xf32, #tpu.memory_space<vmem>>, %arg3: memref<1x128xf32, #tpu.memory_space<vmem>>, %arg4: memref<1x128xf32, #tpu.memory_space<vmem>>, %arg5: memref<128x128xf32, #tpu.memory_space<vmem>>, %arg6: memref<1x128xf32, #tpu.memory_space<vmem>>, %arg7: memref<128x128xf32, #tpu.memory_space<vmem>>, %arg8: memref<1x128xf32, #tpu.memory_space<vmem>>, %arg9: memref<8x128xf32, #tpu.memory_space<vmem>>, %arg10: memref<2x128xf32, #tpu.memory_space<vmem>>) attributes {dimension_semantics = [#tpu.dimension_semantics<arbitrary>], iteration_bounds = array<i64: 1>, scalar_prefetch = 1 : i64, scratch_operands = 0 : i64, tpu.core_type = #tpu.core_type<tc>, window_params = [{pipeline_mode = #tpu.pipeline_mode<synchronous>, transform_indices = @transform_0, window_bounds = array<i64: 64, 128>}, {pipeline_mode = #tpu.pipeline_mode<synchronous>, transform_indices = @transform_1, window_bounds = array<i64: 1, 128>}, {pipeline_mode = #tpu.pipeline_mode<synchronous>, transform_indices = @transform_2, window_bounds = array<i64: 1, 128>}, {pipeline_mode = #tpu.pipeline_mode<synchronous>, transform_indices = @transform_3, window_bounds = array<i64: 128, 128>}, {pipeline_mode = #tpu.pipeline_mode<synchronous>, transform_indices = @transform_4, window_bounds = array<i64: 1, 128>}, {pipeline_mode = #tpu.pipeline_mode<synchronous>, transform_indices = @transform_5, window_bounds = array<i64: 128, 128>}, {pipeline_mode = #tpu.pipeline_mode<synchronous>, transform_indices = @transform_6, window_bounds = array<i64: 1, 128>}, {pipeline_mode = #tpu.pipeline_mode<synchronous>, transform_indices = @transform_7, window_bounds = array<i64: 8, 128>}, {pipeline_mode = #tpu.pipeline_mode<synchronous>, transform_indices = @transform_8, window_bounds = array<i64: 2, 128>}]} {
    %0 = tpu.iota {dimensions = array<i32: 1>} : vector<1x128xi32>
    %c32_i32 = arith.constant 32 : i32
    %1 = vector.broadcast %c32_i32 : i32 to vector<1x128xi32>
    %2 = arith.cmpi slt, %0, %1 : vector<1x128xi32>
    %c0 = arith.constant 0 : index
    %c0_0 = arith.constant 0 : index
    %3 = vector.load %arg3[%c0, %c0_0] : memref<1x128xf32, #tpu.memory_space<vmem>>, vector<1x128xf32>
    %c0_1 = arith.constant 0 : index
    %c0_2 = arith.constant 0 : index
    %4 = vector.load %arg4[%c0_1, %c0_2] : memref<1x128xf32, #tpu.memory_space<vmem>>, vector<1x128xf32>
    %c0_i32 = arith.constant 0 : i32
    %5 = arith.index_cast %c0_i32 : i32 to index
    %6 = memref.load %arg1[%5] : memref<8xi32, #tpu.memory_space<smem>>
    %7 = arith.index_cast %6 : i32 to index
    %c0_3 = arith.constant 0 : index
    %8 = vector.load %arg2[%7, %c0_3] : memref<64x128xf32, #tpu.memory_space<vmem>>, vector<1x128xf32>
    %cst = arith.constant 0.000000e+00 : f32
    %9 = vector.broadcast %cst : f32 to vector<1x128xf32>
    %10 = arith.maximumf %8, %9 : vector<1x128xf32>
    %11 = arith.select %2, %3, %10 : vector<1x128xi1>, vector<1x128xf32>
    %c0_4 = arith.constant 0 : index
    %c0_5 = arith.constant 0 : index
    %12 = vector.load %arg5[%c0_4, %c0_5] : memref<128x128xf32, #tpu.memory_space<vmem>>, vector<128x128xf32>
    %cst_6 = arith.constant dense<0.000000e+00> : vector<1x128xf32>
    %13 = tpu.matmul %11, %12, %cst_6 {dimension_numbers = #tpu.dot_dimension_numbers<[1], [0], [0], [1], [0, 0, 1, 1], [], []>} : vector<1x128xf32>, vector<128x128xf32>, vector<1x128xf32> -> vector<1x128xf32>
    %c0_7 = arith.constant 0 : index
    %c0_8 = arith.constant 0 : index
    %14 = vector.load %arg6[%c0_7, %c0_8] : memref<1x128xf32, #tpu.memory_space<vmem>>, vector<1x128xf32>
    %15 = arith.addf %13, %14 : vector<1x128xf32>
    %cst_9 = arith.constant 5.000000e-01 : f32
    %16 = vector.broadcast %cst_9 : f32 to vector<1x128xf32>
    %17 = arith.mulf %16, %15 : vector<1x128xf32>
    %18 = math.tanh %17 : vector<1x128xf32>
    %cst_10 = arith.constant 1.000000e+00 : f32
    %19 = vector.broadcast %cst_10 : f32 to vector<1x128xf32>
    %20 = arith.addf %18, %19 : vector<1x128xf32>
    %cst_11 = arith.constant 5.000000e-01 : f32
    %21 = vector.broadcast %cst_11 : f32 to vector<1x128xf32>
    %22 = arith.mulf %21, %20 : vector<1x128xf32>
    %23 = math.tanh %15 : vector<1x128xf32>
    %c96_i32 = arith.constant 96 : i32
    %24 = tpu.dynamic_rotate %22 by %c96_i32 dim 1 : vector<1x128xf32>, i32 -> vector<1x128xf32>
    %c64_i32 = arith.constant 64 : i32
    %25 = tpu.dynamic_rotate %23 by %c64_i32 dim 1 : vector<1x128xf32>, i32 -> vector<1x128xf32>
    %c32_i32_12 = arith.constant 32 : i32
    %26 = tpu.dynamic_rotate %22 by %c32_i32_12 dim 1 : vector<1x128xf32>, i32 -> vector<1x128xf32>
    %27 = arith.mulf %24, %4 : vector<1x128xf32>
    %28 = arith.mulf %22, %25 : vector<1x128xf32>
    %29 = arith.addf %27, %28 : vector<1x128xf32>
    %30 = math.tanh %29 : vector<1x128xf32>
    %31 = arith.mulf %26, %30 : vector<1x128xf32>
    %c0_13 = arith.constant 0 : index
    %c0_14 = arith.constant 0 : index
    %32 = vector.load %arg7[%c0_13, %c0_14] : memref<128x128xf32, #tpu.memory_space<vmem>>, vector<128x128xf32>
    %cst_15 = arith.constant dense<0.000000e+00> : vector<1x128xf32>
    %33 = tpu.matmul %31, %32, %cst_15 {dimension_numbers = #tpu.dot_dimension_numbers<[1], [0], [0], [1], [0, 0, 1, 1], [], []>} : vector<1x128xf32>, vector<128x128xf32>, vector<1x128xf32> -> vector<1x128xf32>
    %c0_16 = arith.constant 0 : index
    %c0_17 = arith.constant 0 : index
    %34 = vector.load %arg8[%c0_16, %c0_17] : memref<1x128xf32, #tpu.memory_space<vmem>>, vector<1x128xf32>
    %35 = arith.addf %33, %34 : vector<1x128xf32>
    %36 = arith.index_cast %c0_i32 : i32 to index
    %c0_18 = arith.constant 0 : index
    %37 = vector.load %arg9[%36, %c0_18] : memref<8x128xf32, #tpu.memory_space<vmem>>, vector<1x128xf32>
    tpu.vector_store %arg9[%36, %c0_18], %35 {strides = array<i32>} : memref<8x128xf32, #tpu.memory_space<vmem>>, vector<1x128xf32>,
    %c1_i32 = arith.constant 1 : i32
    %38 = arith.index_cast %c1_i32 : i32 to index
    %39 = memref.load %arg1[%38] : memref<8xi32, #tpu.memory_space<smem>>
    %40 = arith.index_cast %39 : i32 to index
    %c0_19 = arith.constant 0 : index
    %41 = vector.load %arg2[%40, %c0_19] : memref<64x128xf32, #tpu.memory_space<vmem>>, vector<1x128xf32>
    %cst_20 = arith.constant 0.000000e+00 : f32
    %42 = vector.broadcast %cst_20 : f32 to vector<1x128xf32>
    %43 = arith.maximumf %41, %42 : vector<1x128xf32>
    %44 = arith.select %2, %31, %43 : vector<1x128xi1>, vector<1x128xf32>
    %c0_21 = arith.constant 0 : index
    %c0_22 = arith.constant 0 : index
    %45 = vector.load %arg5[%c0_21, %c0_22] : memref<128x128xf32, #tpu.memory_space<vmem>>, vector<128x128xf32>
    %cst_23 = arith.constant dense<0.000000e+00> : vector<1x128xf32>
    %46 = tpu.matmul %44, %45, %cst_23 {dimension_numbers = #tpu.dot_dimension_numbers<[1], [0], [0], [1], [0, 0, 1, 1], [], []>} : vector<1x128xf32>, vector<128x128xf32>, vector<1x128xf32> -> vector<1x128xf32>
    %c0_24 = arith.constant 0 : index
    %c0_25 = arith.constant 0 : index
    %47 = vector.load %arg6[%c0_24, %c0_25] : memref<1x128xf32, #tpu.memory_space<vmem>>, vector<1x128xf32>
    %48 = arith.addf %46, %47 : vector<1x128xf32>
    %cst_26 = arith.constant 5.000000e-01 : f32
    %49 = vector.broadcast %cst_26 : f32 to vector<1x128xf32>
    %50 = arith.mulf %49, %48 : vector<1x128xf32>
    %51 = math.tanh %50 : vector<1x128xf32>
    %cst_27 = arith.constant 1.000000e+00 : f32
    %52 = vector.broadcast %cst_27 : f32 to vector<1x128xf32>
    %53 = arith.addf %51, %52 : vector<1x128xf32>
    %cst_28 = arith.constant 5.000000e-01 : f32
    %54 = vector.broadcast %cst_28 : f32 to vector<1x128xf32>
    %55 = arith.mulf %54, %53 : vector<1x128xf32>
    %56 = math.tanh %48 : vector<1x128xf32>
    %c96_i32_29 = arith.constant 96 : i32
    %57 = tpu.dynamic_rotate %55 by %c96_i32_29 dim 1 : vector<1x128xf32>, i32 -> vector<1x128xf32>
    %c64_i32_30 = arith.constant 64 : i32
    %58 = tpu.dynamic_rotate %56 by %c64_i32_30 dim 1 : vector<1x128xf32>, i32 -> vector<1x128xf32>
    %c32_i32_31 = arith.constant 32 : i32
    %59 = tpu.dynamic_rotate %55 by %c32_i32_31 dim 1 : vector<1x128xf32>, i32 -> vector<1x128xf32>
    %60 = arith.mulf %57, %29 : vector<1x128xf32>
    %61 = arith.mulf %55, %58 : vector<1x128xf32>
    %62 = arith.addf %60, %61 : vector<1x128xf32>
    %63 = math.tanh %62 : vector<1x128xf32>
    %64 = arith.mulf %59, %63 : vector<1x128xf32>
    %c0_32 = arith.constant 0 : index
    %c0_33 = arith.constant 0 : index
    %65 = vector.load %arg7[%c0_32, %c0_33] : memref<128x128xf32, #tpu.memory_space<vmem>>, vector<128x128xf32>
    %cst_34 = arith.constant dense<0.000000e+00> : vector<1x128xf32>
    %66 = tpu.matmul %64, %65, %cst_34 {dimension_numbers = #tpu.dot_dimension_numbers<[1], [0], [0], [1], [0, 0, 1, 1], [], []>} : vector<1x128xf32>, vector<128x128xf32>, vector<1x128xf32> -> vector<1x128xf32>
    %c0_35 = arith.constant 0 : index
    %c0_36 = arith.constant 0 : index
    %67 = vector.load %arg8[%c0_35, %c0_36] : memref<1x128xf32, #tpu.memory_space<vmem>>, vector<1x128xf32>
    %68 = arith.addf %66, %67 : vector<1x128xf32>
    %69 = arith.index_cast %c1_i32 : i32 to index
    %c0_37 = arith.constant 0 : index
    %70 = vector.load %arg9[%69, %c0_37] : memref<8x128xf32, #tpu.memory_space<vmem>>, vector<1x128xf32>
    tpu.vector_store %arg9[%69, %c0_37], %68 {strides = array<i32>} : memref<8x128xf32, #tpu.memory_space<vmem>>, vector<1x128xf32>,
    %c2_i32 = arith.constant 2 : i32
    %71 = arith.index_cast %c2_i32 : i32 to index
    %72 = memref.load %arg1[%71] : memref<8xi32, #tpu.memory_space<smem>>
    %73 = arith.index_cast %72 : i32 to index
    %c0_38 = arith.constant 0 : index
    %74 = vector.load %arg2[%73, %c0_38] : memref<64x128xf32, #tpu.memory_space<vmem>>, vector<1x128xf32>
    %cst_39 = arith.constant 0.000000e+00 : f32
    %75 = vector.broadcast %cst_39 : f32 to vector<1x128xf32>
    %76 = arith.maximumf %74, %75 : vector<1x128xf32>
    %77 = arith.select %2, %64, %76 : vector<1x128xi1>, vector<1x128xf32>
    %c0_40 = arith.constant 0 : index
    %c0_41 = arith.constant 0 : index
    %78 = vector.load %arg5[%c0_40, %c0_41] : memref<128x128xf32, #tpu.memory_space<vmem>>, vector<128x128xf32>
    %cst_42 = arith.constant dense<0.000000e+00> : vector<1x128xf32>
    %79 = tpu.matmul %77, %78, %cst_42 {dimension_numbers = #tpu.dot_dimension_numbers<[1], [0], [0], [1], [0, 0, 1, 1], [], []>} : vector<1x128xf32>, vector<128x128xf32>, vector<1x128xf32> -> vector<1x128xf32>
    %c0_43 = arith.constant 0 : index
    %c0_44 = arith.constant 0 : index
    %80 = vector.load %arg6[%c0_43, %c0_44] : memref<1x128xf32, #tpu.memory_space<vmem>>, vector<1x128xf32>
    %81 = arith.addf %79, %80 : vector<1x128xf32>
    %cst_45 = arith.constant 5.000000e-01 : f32
    %82 = vector.broadcast %cst_45 : f32 to vector<1x128xf32>
    %83 = arith.mulf %82, %81 : vector<1x128xf32>
    %84 = math.tanh %83 : vector<1x128xf32>
    %cst_46 = arith.constant 1.000000e+00 : f32
    %85 = vector.broadcast %cst_46 : f32 to vector<1x128xf32>
    %86 = arith.addf %84, %85 : vector<1x128xf32>
    %cst_47 = arith.constant 5.000000e-01 : f32
    %87 = vector.broadcast %cst_47 : f32 to vector<1x128xf32>
    %88 = arith.mulf %87, %86 : vector<1x128xf32>
    %89 = math.tanh %81 : vector<1x128xf32>
    %c96_i32_48 = arith.constant 96 : i32
    %90 = tpu.dynamic_rotate %88 by %c96_i32_48 dim 1 : vector<1x128xf32>, i32 -> vector<1x128xf32>
    %c64_i32_49 = arith.constant 64 : i32
    %91 = tpu.dynamic_rotate %89 by %c64_i32_49 dim 1 : vector<1x128xf32>, i32 -> vector<1x128xf32>
    %c32_i32_50 = arith.constant 32 : i32
    %92 = tpu.dynamic_rotate %88 by %c32_i32_50 dim 1 : vector<1x128xf32>, i32 -> vector<1x128xf32>
    %93 = arith.mulf %90, %62 : vector<1x128xf32>
    %94 = arith.mulf %88, %91 : vector<1x128xf32>
    %95 = arith.addf %93, %94 : vector<1x128xf32>
    %96 = math.tanh %95 : vector<1x128xf32>
    %97 = arith.mulf %92, %96 : vector<1x128xf32>
    %c0_51 = arith.constant 0 : index
    %c0_52 = arith.constant 0 : index
    %98 = vector.load %arg7[%c0_51, %c0_52] : memref<128x128xf32, #tpu.memory_space<vmem>>, vector<128x128xf32>
    %cst_53 = arith.constant dense<0.000000e+00> : vector<1x128xf32>
    %99 = tpu.matmul %97, %98, %cst_53 {dimension_numbers = #tpu.dot_dimension_numbers<[1], [0], [0], [1], [0, 0, 1, 1], [], []>} : vector<1x128xf32>, vector<128x128xf32>, vector<1x128xf32> -> vector<1x128xf32>
    %c0_54 = arith.constant 0 : index
    %c0_55 = arith.constant 0 : index
    %100 = vector.load %arg8[%c0_54, %c0_55] : memref<1x128xf32, #tpu.memory_space<vmem>>, vector<1x128xf32>
    %101 = arith.addf %99, %100 : vector<1x128xf32>
    %102 = arith.index_cast %c2_i32 : i32 to index
    %c0_56 = arith.constant 0 : index
    %103 = vector.load %arg9[%102, %c0_56] : memref<8x128xf32, #tpu.memory_space<vmem>>, vector<1x128xf32>
    tpu.vector_store %arg9[%102, %c0_56], %101 {strides = array<i32>} : memref<8x128xf32, #tpu.memory_space<vmem>>, vector<1x128xf32>,
    %c3_i32 = arith.constant 3 : i32
    %104 = arith.index_cast %c3_i32 : i32 to index
    %105 = memref.load %arg1[%104] : memref<8xi32, #tpu.memory_space<smem>>
    %106 = arith.index_cast %105 : i32 to index
    %c0_57 = arith.constant 0 : index
    %107 = vector.load %arg2[%106, %c0_57] : memref<64x128xf32, #tpu.memory_space<vmem>>, vector<1x128xf32>
    %cst_58 = arith.constant 0.000000e+00 : f32
    %108 = vector.broadcast %cst_58 : f32 to vector<1x128xf32>
    %109 = arith.maximumf %107, %108 : vector<1x128xf32>
    %110 = arith.select %2, %97, %109 : vector<1x128xi1>, vector<1x128xf32>
    %c0_59 = arith.constant 0 : index
    %c0_60 = arith.constant 0 : index
    %111 = vector.load %arg5[%c0_59, %c0_60] : memref<128x128xf32, #tpu.memory_space<vmem>>, vector<128x128xf32>
    %cst_61 = arith.constant dense<0.000000e+00> : vector<1x128xf32>
    %112 = tpu.matmul %110, %111, %cst_61 {dimension_numbers = #tpu.dot_dimension_numbers<[1], [0], [0], [1], [0, 0, 1, 1], [], []>} : vector<1x128xf32>, vector<128x128xf32>, vector<1x128xf32> -> vector<1x128xf32>
    %c0_62 = arith.constant 0 : index
    %c0_63 = arith.constant 0 : index
    %113 = vector.load %arg6[%c0_62, %c0_63] : memref<1x128xf32, #tpu.memory_space<vmem>>, vector<1x128xf32>
    %114 = arith.addf %112, %113 : vector<1x128xf32>
    %cst_64 = arith.constant 5.000000e-01 : f32
    %115 = vector.broadcast %cst_64 : f32 to vector<1x128xf32>
    %116 = arith.mulf %115, %114 : vector<1x128xf32>
    %117 = math.tanh %116 : vector<1x128xf32>
    %cst_65 = arith.constant 1.000000e+00 : f32
    %118 = vector.broadcast %cst_65 : f32 to vector<1x128xf32>
    %119 = arith.addf %117, %118 : vector<1x128xf32>
    %cst_66 = arith.constant 5.000000e-01 : f32
    %120 = vector.broadcast %cst_66 : f32 to vector<1x128xf32>
    %121 = arith.mulf %120, %119 : vector<1x128xf32>
    %122 = math.tanh %114 : vector<1x128xf32>
    %c96_i32_67 = arith.constant 96 : i32
    %123 = tpu.dynamic_rotate %121 by %c96_i32_67 dim 1 : vector<1x128xf32>, i32 -> vector<1x128xf32>
    %c64_i32_68 = arith.constant 64 : i32
    %124 = tpu.dynamic_rotate %122 by %c64_i32_68 dim 1 : vector<1x128xf32>, i32 -> vector<1x128xf32>
    %c32_i32_69 = arith.constant 32 : i32
    %125 = tpu.dynamic_rotate %121 by %c32_i32_69 dim 1 : vector<1x128xf32>, i32 -> vector<1x128xf32>
    %126 = arith.mulf %123, %95 : vector<1x128xf32>
    %127 = arith.mulf %121, %124 : vector<1x128xf32>
    %128 = arith.addf %126, %127 : vector<1x128xf32>
    %129 = math.tanh %128 : vector<1x128xf32>
    %130 = arith.mulf %125, %129 : vector<1x128xf32>
    %c0_70 = arith.constant 0 : index
    %c0_71 = arith.constant 0 : index
    %131 = vector.load %arg7[%c0_70, %c0_71] : memref<128x128xf32, #tpu.memory_space<vmem>>, vector<128x128xf32>
    %cst_72 = arith.constant dense<0.000000e+00> : vector<1x128xf32>
    %132 = tpu.matmul %130, %131, %cst_72 {dimension_numbers = #tpu.dot_dimension_numbers<[1], [0], [0], [1], [0, 0, 1, 1], [], []>} : vector<1x128xf32>, vector<128x128xf32>, vector<1x128xf32> -> vector<1x128xf32>
    %c0_73 = arith.constant 0 : index
    %c0_74 = arith.constant 0 : index
    %133 = vector.load %arg8[%c0_73, %c0_74] : memref<1x128xf32, #tpu.memory_space<vmem>>, vector<1x128xf32>
    %134 = arith.addf %132, %133 : vector<1x128xf32>
    %135 = arith.index_cast %c3_i32 : i32 to index
    %c0_75 = arith.constant 0 : index
    %136 = vector.load %arg9[%135, %c0_75] : memref<8x128xf32, #tpu.memory_space<vmem>>, vector<1x128xf32>
    tpu.vector_store %arg9[%135, %c0_75], %134 {strides = array<i32>} : memref<8x128xf32, #tpu.memory_space<vmem>>, vector<1x128xf32>,
    %c4_i32 = arith.constant 4 : i32
    %137 = arith.index_cast %c4_i32 : i32 to index
    %138 = memref.load %arg1[%137] : memref<8xi32, #tpu.memory_space<smem>>
    %139 = arith.index_cast %138 : i32 to index
    %c0_76 = arith.constant 0 : index
    %140 = vector.load %arg2[%139, %c0_76] : memref<64x128xf32, #tpu.memory_space<vmem>>, vector<1x128xf32>
    %cst_77 = arith.constant 0.000000e+00 : f32
    %141 = vector.broadcast %cst_77 : f32 to vector<1x128xf32>
    %142 = arith.maximumf %140, %141 : vector<1x128xf32>
    %143 = arith.select %2, %130, %142 : vector<1x128xi1>, vector<1x128xf32>
    %c0_78 = arith.constant 0 : index
    %c0_79 = arith.constant 0 : index
    %144 = vector.load %arg5[%c0_78, %c0_79] : memref<128x128xf32, #tpu.memory_space<vmem>>, vector<128x128xf32>
    %cst_80 = arith.constant dense<0.000000e+00> : vector<1x128xf32>
    %145 = tpu.matmul %143, %144, %cst_80 {dimension_numbers = #tpu.dot_dimension_numbers<[1], [0], [0], [1], [0, 0, 1, 1], [], []>} : vector<1x128xf32>, vector<128x128xf32>, vector<1x128xf32> -> vector<1x128xf32>
    %c0_81 = arith.constant 0 : index
    %c0_82 = arith.constant 0 : index
    %146 = vector.load %arg6[%c0_81, %c0_82] : memref<1x128xf32, #tpu.memory_space<vmem>>, vector<1x128xf32>
    %147 = arith.addf %145, %146 : vector<1x128xf32>
    %cst_83 = arith.constant 5.000000e-01 : f32
    %148 = vector.broadcast %cst_83 : f32 to vector<1x128xf32>
    %149 = arith.mulf %148, %147 : vector<1x128xf32>
    %150 = math.tanh %149 : vector<1x128xf32>
    %cst_84 = arith.constant 1.000000e+00 : f32
    %151 = vector.broadcast %cst_84 : f32 to vector<1x128xf32>
    %152 = arith.addf %150, %151 : vector<1x128xf32>
    %cst_85 = arith.constant 5.000000e-01 : f32
    %153 = vector.broadcast %cst_85 : f32 to vector<1x128xf32>
    %154 = arith.mulf %153, %152 : vector<1x128xf32>
    %155 = math.tanh %147 : vector<1x128xf32>
    %c96_i32_86 = arith.constant 96 : i32
    %156 = tpu.dynamic_rotate %154 by %c96_i32_86 dim 1 : vector<1x128xf32>, i32 -> vector<1x128xf32>
    %c64_i32_87 = arith.constant 64 : i32
    %157 = tpu.dynamic_rotate %155 by %c64_i32_87 dim 1 : vector<1x128xf32>, i32 -> vector<1x128xf32>
    %c32_i32_88 = arith.constant 32 : i32
    %158 = tpu.dynamic_rotate %154 by %c32_i32_88 dim 1 : vector<1x128xf32>, i32 -> vector<1x128xf32>
    %159 = arith.mulf %156, %128 : vector<1x128xf32>
    %160 = arith.mulf %154, %157 : vector<1x128xf32>
    %161 = arith.addf %159, %160 : vector<1x128xf32>
    %162 = math.tanh %161 : vector<1x128xf32>
    %163 = arith.mulf %158, %162 : vector<1x128xf32>
    %c0_89 = arith.constant 0 : index
    %c0_90 = arith.constant 0 : index
    %164 = vector.load %arg7[%c0_89, %c0_90] : memref<128x128xf32, #tpu.memory_space<vmem>>, vector<128x128xf32>
    %cst_91 = arith.constant dense<0.000000e+00> : vector<1x128xf32>
    %165 = tpu.matmul %163, %164, %cst_91 {dimension_numbers = #tpu.dot_dimension_numbers<[1], [0], [0], [1], [0, 0, 1, 1], [], []>} : vector<1x128xf32>, vector<128x128xf32>, vector<1x128xf32> -> vector<1x128xf32>
    %c0_92 = arith.constant 0 : index
    %c0_93 = arith.constant 0 : index
    %166 = vector.load %arg8[%c0_92, %c0_93] : memref<1x128xf32, #tpu.memory_space<vmem>>, vector<1x128xf32>
    %167 = arith.addf %165, %166 : vector<1x128xf32>
    %168 = arith.index_cast %c4_i32 : i32 to index
    %c0_94 = arith.constant 0 : index
    %169 = vector.load %arg9[%168, %c0_94] : memref<8x128xf32, #tpu.memory_space<vmem>>, vector<1x128xf32>
    tpu.vector_store %arg9[%168, %c0_94], %167 {strides = array<i32>} : memref<8x128xf32, #tpu.memory_space<vmem>>, vector<1x128xf32>,
    %c5_i32 = arith.constant 5 : i32
    %170 = arith.index_cast %c5_i32 : i32 to index
    %171 = memref.load %arg1[%170] : memref<8xi32, #tpu.memory_space<smem>>
    %172 = arith.index_cast %171 : i32 to index
    %c0_95 = arith.constant 0 : index
    %173 = vector.load %arg2[%172, %c0_95] : memref<64x128xf32, #tpu.memory_space<vmem>>, vector<1x128xf32>
    %cst_96 = arith.constant 0.000000e+00 : f32
    %174 = vector.broadcast %cst_96 : f32 to vector<1x128xf32>
    %175 = arith.maximumf %173, %174 : vector<1x128xf32>
    %176 = arith.select %2, %163, %175 : vector<1x128xi1>, vector<1x128xf32>
    %c0_97 = arith.constant 0 : index
    %c0_98 = arith.constant 0 : index
    %177 = vector.load %arg5[%c0_97, %c0_98] : memref<128x128xf32, #tpu.memory_space<vmem>>, vector<128x128xf32>
    %cst_99 = arith.constant dense<0.000000e+00> : vector<1x128xf32>
    %178 = tpu.matmul %176, %177, %cst_99 {dimension_numbers = #tpu.dot_dimension_numbers<[1], [0], [0], [1], [0, 0, 1, 1], [], []>} : vector<1x128xf32>, vector<128x128xf32>, vector<1x128xf32> -> vector<1x128xf32>
    %c0_100 = arith.constant 0 : index
    %c0_101 = arith.constant 0 : index
    %179 = vector.load %arg6[%c0_100, %c0_101] : memref<1x128xf32, #tpu.memory_space<vmem>>, vector<1x128xf32>
    %180 = arith.addf %178, %179 : vector<1x128xf32>
    %cst_102 = arith.constant 5.000000e-01 : f32
    %181 = vector.broadcast %cst_102 : f32 to vector<1x128xf32>
    %182 = arith.mulf %181, %180 : vector<1x128xf32>
    %183 = math.tanh %182 : vector<1x128xf32>
    %cst_103 = arith.constant 1.000000e+00 : f32
    %184 = vector.broadcast %cst_103 : f32 to vector<1x128xf32>
    %185 = arith.addf %183, %184 : vector<1x128xf32>
    %cst_104 = arith.constant 5.000000e-01 : f32
    %186 = vector.broadcast %cst_104 : f32 to vector<1x128xf32>
    %187 = arith.mulf %186, %185 : vector<1x128xf32>
    %188 = math.tanh %180 : vector<1x128xf32>
    %c96_i32_105 = arith.constant 96 : i32
    %189 = tpu.dynamic_rotate %187 by %c96_i32_105 dim 1 : vector<1x128xf32>, i32 -> vector<1x128xf32>
    %c64_i32_106 = arith.constant 64 : i32
    %190 = tpu.dynamic_rotate %188 by %c64_i32_106 dim 1 : vector<1x128xf32>, i32 -> vector<1x128xf32>
    %c32_i32_107 = arith.constant 32 : i32
    %191 = tpu.dynamic_rotate %187 by %c32_i32_107 dim 1 : vector<1x128xf32>, i32 -> vector<1x128xf32>
    %192 = arith.mulf %189, %161 : vector<1x128xf32>
    %193 = arith.mulf %187, %190 : vector<1x128xf32>
    %194 = arith.addf %192, %193 : vector<1x128xf32>
    %195 = math.tanh %194 : vector<1x128xf32>
    %196 = arith.mulf %191, %195 : vector<1x128xf32>
    %c0_108 = arith.constant 0 : index
    %c0_109 = arith.constant 0 : index
    %197 = vector.load %arg7[%c0_108, %c0_109] : memref<128x128xf32, #tpu.memory_space<vmem>>, vector<128x128xf32>
    %cst_110 = arith.constant dense<0.000000e+00> : vector<1x128xf32>
    %198 = tpu.matmul %196, %197, %cst_110 {dimension_numbers = #tpu.dot_dimension_numbers<[1], [0], [0], [1], [0, 0, 1, 1], [], []>} : vector<1x128xf32>, vector<128x128xf32>, vector<1x128xf32> -> vector<1x128xf32>
    %c0_111 = arith.constant 0 : index
    %c0_112 = arith.constant 0 : index
    %199 = vector.load %arg8[%c0_111, %c0_112] : memref<1x128xf32, #tpu.memory_space<vmem>>, vector<1x128xf32>
    %200 = arith.addf %198, %199 : vector<1x128xf32>
    %201 = arith.index_cast %c5_i32 : i32 to index
    %c0_113 = arith.constant 0 : index
    %202 = vector.load %arg9[%201, %c0_113] : memref<8x128xf32, #tpu.memory_space<vmem>>, vector<1x128xf32>
    tpu.vector_store %arg9[%201, %c0_113], %200 {strides = array<i32>} : memref<8x128xf32, #tpu.memory_space<vmem>>, vector<1x128xf32>,
    %c6_i32 = arith.constant 6 : i32
    %203 = arith.index_cast %c6_i32 : i32 to index
    %204 = memref.load %arg1[%203] : memref<8xi32, #tpu.memory_space<smem>>
    %205 = arith.index_cast %204 : i32 to index
    %c0_114 = arith.constant 0 : index
    %206 = vector.load %arg2[%205, %c0_114] : memref<64x128xf32, #tpu.memory_space<vmem>>, vector<1x128xf32>
    %cst_115 = arith.constant 0.000000e+00 : f32
    %207 = vector.broadcast %cst_115 : f32 to vector<1x128xf32>
    %208 = arith.maximumf %206, %207 : vector<1x128xf32>
    %209 = arith.select %2, %196, %208 : vector<1x128xi1>, vector<1x128xf32>
    %c0_116 = arith.constant 0 : index
    %c0_117 = arith.constant 0 : index
    %210 = vector.load %arg5[%c0_116, %c0_117] : memref<128x128xf32, #tpu.memory_space<vmem>>, vector<128x128xf32>
    %cst_118 = arith.constant dense<0.000000e+00> : vector<1x128xf32>
    %211 = tpu.matmul %209, %210, %cst_118 {dimension_numbers = #tpu.dot_dimension_numbers<[1], [0], [0], [1], [0, 0, 1, 1], [], []>} : vector<1x128xf32>, vector<128x128xf32>, vector<1x128xf32> -> vector<1x128xf32>
    %c0_119 = arith.constant 0 : index
    %c0_120 = arith.constant 0 : index
    %212 = vector.load %arg6[%c0_119, %c0_120] : memref<1x128xf32, #tpu.memory_space<vmem>>, vector<1x128xf32>
    %213 = arith.addf %211, %212 : vector<1x128xf32>
    %cst_121 = arith.constant 5.000000e-01 : f32
    %214 = vector.broadcast %cst_121 : f32 to vector<1x128xf32>
    %215 = arith.mulf %214, %213 : vector<1x128xf32>
    %216 = math.tanh %215 : vector<1x128xf32>
    %cst_122 = arith.constant 1.000000e+00 : f32
    %217 = vector.broadcast %cst_122 : f32 to vector<1x128xf32>
    %218 = arith.addf %216, %217 : vector<1x128xf32>
    %cst_123 = arith.constant 5.000000e-01 : f32
    %219 = vector.broadcast %cst_123 : f32 to vector<1x128xf32>
    %220 = arith.mulf %219, %218 : vector<1x128xf32>
    %221 = math.tanh %213 : vector<1x128xf32>
    %c96_i32_124 = arith.constant 96 : i32
    %222 = tpu.dynamic_rotate %220 by %c96_i32_124 dim 1 : vector<1x128xf32>, i32 -> vector<1x128xf32>
    %c64_i32_125 = arith.constant 64 : i32
    %223 = tpu.dynamic_rotate %221 by %c64_i32_125 dim 1 : vector<1x128xf32>, i32 -> vector<1x128xf32>
    %c32_i32_126 = arith.constant 32 : i32
    %224 = tpu.dynamic_rotate %220 by %c32_i32_126 dim 1 : vector<1x128xf32>, i32 -> vector<1x128xf32>
    %225 = arith.mulf %222, %194 : vector<1x128xf32>
    %226 = arith.mulf %220, %223 : vector<1x128xf32>
    %227 = arith.addf %225, %226 : vector<1x128xf32>
    %228 = math.tanh %227 : vector<1x128xf32>
    %229 = arith.mulf %224, %228 : vector<1x128xf32>
    %c0_127 = arith.constant 0 : index
    %c0_128 = arith.constant 0 : index
    %230 = vector.load %arg7[%c0_127, %c0_128] : memref<128x128xf32, #tpu.memory_space<vmem>>, vector<128x128xf32>
    %cst_129 = arith.constant dense<0.000000e+00> : vector<1x128xf32>
    %231 = tpu.matmul %229, %230, %cst_129 {dimension_numbers = #tpu.dot_dimension_numbers<[1], [0], [0], [1], [0, 0, 1, 1], [], []>} : vector<1x128xf32>, vector<128x128xf32>, vector<1x128xf32> -> vector<1x128xf32>
    %c0_130 = arith.constant 0 : index
    %c0_131 = arith.constant 0 : index
    %232 = vector.load %arg8[%c0_130, %c0_131] : memref<1x128xf32, #tpu.memory_space<vmem>>, vector<1x128xf32>
    %233 = arith.addf %231, %232 : vector<1x128xf32>
    %234 = arith.index_cast %c6_i32 : i32 to index
    %c0_132 = arith.constant 0 : index
    %235 = vector.load %arg9[%234, %c0_132] : memref<8x128xf32, #tpu.memory_space<vmem>>, vector<1x128xf32>
    tpu.vector_store %arg9[%234, %c0_132], %233 {strides = array<i32>} : memref<8x128xf32, #tpu.memory_space<vmem>>, vector<1x128xf32>,
    %c7_i32 = arith.constant 7 : i32
    %236 = arith.index_cast %c7_i32 : i32 to index
    %237 = memref.load %arg1[%236] : memref<8xi32, #tpu.memory_space<smem>>
    %238 = arith.index_cast %237 : i32 to index
    %c0_133 = arith.constant 0 : index
    %239 = vector.load %arg2[%238, %c0_133] : memref<64x128xf32, #tpu.memory_space<vmem>>, vector<1x128xf32>
    %cst_134 = arith.constant 0.000000e+00 : f32
    %240 = vector.broadcast %cst_134 : f32 to vector<1x128xf32>
    %241 = arith.maximumf %239, %240 : vector<1x128xf32>
    %242 = arith.select %2, %229, %241 : vector<1x128xi1>, vector<1x128xf32>
    %c0_135 = arith.constant 0 : index
    %c0_136 = arith.constant 0 : index
    %243 = vector.load %arg5[%c0_135, %c0_136] : memref<128x128xf32, #tpu.memory_space<vmem>>, vector<128x128xf32>
    %cst_137 = arith.constant dense<0.000000e+00> : vector<1x128xf32>
    %244 = tpu.matmul %242, %243, %cst_137 {dimension_numbers = #tpu.dot_dimension_numbers<[1], [0], [0], [1], [0, 0, 1, 1], [], []>} : vector<1x128xf32>, vector<128x128xf32>, vector<1x128xf32> -> vector<1x128xf32>
    %c0_138 = arith.constant 0 : index
    %c0_139 = arith.constant 0 : index
    %245 = vector.load %arg6[%c0_138, %c0_139] : memref<1x128xf32, #tpu.memory_space<vmem>>, vector<1x128xf32>
    %246 = arith.addf %244, %245 : vector<1x128xf32>
    %cst_140 = arith.constant 5.000000e-01 : f32
    %247 = vector.broadcast %cst_140 : f32 to vector<1x128xf32>
    %248 = arith.mulf %247, %246 : vector<1x128xf32>
    %249 = math.tanh %248 : vector<1x128xf32>
    %cst_141 = arith.constant 1.000000e+00 : f32
    %250 = vector.broadcast %cst_141 : f32 to vector<1x128xf32>
    %251 = arith.addf %249, %250 : vector<1x128xf32>
    %cst_142 = arith.constant 5.000000e-01 : f32
    %252 = vector.broadcast %cst_142 : f32 to vector<1x128xf32>
    %253 = arith.mulf %252, %251 : vector<1x128xf32>
    %254 = math.tanh %246 : vector<1x128xf32>
    %c96_i32_143 = arith.constant 96 : i32
    %255 = tpu.dynamic_rotate %253 by %c96_i32_143 dim 1 : vector<1x128xf32>, i32 -> vector<1x128xf32>
    %c64_i32_144 = arith.constant 64 : i32
    %256 = tpu.dynamic_rotate %254 by %c64_i32_144 dim 1 : vector<1x128xf32>, i32 -> vector<1x128xf32>
    %c32_i32_145 = arith.constant 32 : i32
    %257 = tpu.dynamic_rotate %253 by %c32_i32_145 dim 1 : vector<1x128xf32>, i32 -> vector<1x128xf32>
    %258 = arith.mulf %255, %227 : vector<1x128xf32>
    %259 = arith.mulf %253, %256 : vector<1x128xf32>
    %260 = arith.addf %258, %259 : vector<1x128xf32>
    %261 = math.tanh %260 : vector<1x128xf32>
    %262 = arith.mulf %257, %261 : vector<1x128xf32>
    %c0_146 = arith.constant 0 : index
    %c0_147 = arith.constant 0 : index
    %263 = vector.load %arg7[%c0_146, %c0_147] : memref<128x128xf32, #tpu.memory_space<vmem>>, vector<128x128xf32>
    %cst_148 = arith.constant dense<0.000000e+00> : vector<1x128xf32>
    %264 = tpu.matmul %262, %263, %cst_148 {dimension_numbers = #tpu.dot_dimension_numbers<[1], [0], [0], [1], [0, 0, 1, 1], [], []>} : vector<1x128xf32>, vector<128x128xf32>, vector<1x128xf32> -> vector<1x128xf32>
    %c0_149 = arith.constant 0 : index
    %c0_150 = arith.constant 0 : index
    %265 = vector.load %arg8[%c0_149, %c0_150] : memref<1x128xf32, #tpu.memory_space<vmem>>, vector<1x128xf32>
    %266 = arith.addf %264, %265 : vector<1x128xf32>
    %267 = arith.index_cast %c7_i32 : i32 to index
    %c0_151 = arith.constant 0 : index
    %268 = vector.load %arg9[%267, %c0_151] : memref<8x128xf32, #tpu.memory_space<vmem>>, vector<1x128xf32>
    tpu.vector_store %arg9[%267, %c0_151], %266 {strides = array<i32>} : memref<8x128xf32, #tpu.memory_space<vmem>>, vector<1x128xf32>,
    %c8_i32 = arith.constant 8 : i32
    %cst_152 = arith.constant 0.000000e+00 : f32
    %269 = vector.broadcast %cst_152 : f32 to vector<1x128xf32>
    %270 = arith.select %2, %262, %269 : vector<1x128xi1>, vector<1x128xf32>
    %c0_153 = arith.constant 0 : index
    %c0_154 = arith.constant 0 : index
    %271 = vector.load %arg10[%c0_153, %c0_154] : memref<2x128xf32, #tpu.memory_space<vmem>>, vector<1x128xf32>
    tpu.vector_store %arg10[%c0_153, %c0_154], %270 {strides = array<i32>} : memref<2x128xf32, #tpu.memory_space<vmem>>, vector<1x128xf32>,
    %cst_155 = arith.constant 0.000000e+00 : f32
    %272 = vector.broadcast %cst_155 : f32 to vector<1x128xf32>
    %273 = arith.select %2, %260, %272 : vector<1x128xi1>, vector<1x128xf32>
    %c1 = arith.constant 1 : index
    %c0_156 = arith.constant 0 : index
    %274 = vector.load %arg10[%c1, %c0_156] : memref<2x128xf32, #tpu.memory_space<vmem>>, vector<1x128xf32>
    tpu.vector_store %arg10[%c1, %c0_156], %273 {strides = array<i32>} : memref<2x128xf32, #tpu.memory_space<vmem>>, vector<1x128xf32>,
    return
  }
  func.func @transform_0(%arg0: i32, %arg1: memref<8xi32, #tpu.memory_space<smem>>) -> (i32, i32) {
    %c0_i32 = arith.constant 0 : i32
    %c0_i32_0 = arith.constant 0 : i32
    %c0_i32_1 = arith.constant 0 : i32
    return %c0_i32, %c0_i32_0 : i32, i32
  }
  func.func @transform_1(%arg0: i32, %arg1: memref<8xi32, #tpu.memory_space<smem>>) -> (i32, i32) {
    %c0_i32 = arith.constant 0 : i32
    %c0_i32_0 = arith.constant 0 : i32
    %c0_i32_1 = arith.constant 0 : i32
    return %c0_i32, %c0_i32_0 : i32, i32
  }
  func.func @transform_2(%arg0: i32, %arg1: memref<8xi32, #tpu.memory_space<smem>>) -> (i32, i32) {
    %c0_i32 = arith.constant 0 : i32
    %c0_i32_0 = arith.constant 0 : i32
    %c0_i32_1 = arith.constant 0 : i32
    return %c0_i32, %c0_i32_0 : i32, i32
  }
  func.func @transform_3(%arg0: i32, %arg1: memref<8xi32, #tpu.memory_space<smem>>) -> (i32, i32) {
    %c0_i32 = arith.constant 0 : i32
    %c0_i32_0 = arith.constant 0 : i32
    %c0_i32_1 = arith.constant 0 : i32
    return %c0_i32, %c0_i32_0 : i32, i32
  }
  func.func @transform_4(%arg0: i32, %arg1: memref<8xi32, #tpu.memory_space<smem>>) -> (i32, i32) {
    %c0_i32 = arith.constant 0 : i32
    %c0_i32_0 = arith.constant 0 : i32
    %c0_i32_1 = arith.constant 0 : i32
    return %c0_i32, %c0_i32_0 : i32, i32
  }
  func.func @transform_5(%arg0: i32, %arg1: memref<8xi32, #tpu.memory_space<smem>>) -> (i32, i32) {
    %c0_i32 = arith.constant 0 : i32
    %c0_i32_0 = arith.constant 0 : i32
    %c0_i32_1 = arith.constant 0 : i32
    return %c0_i32, %c0_i32_0 : i32, i32
  }
  func.func @transform_6(%arg0: i32, %arg1: memref<8xi32, #tpu.memory_space<smem>>) -> (i32, i32) {
    %c0_i32 = arith.constant 0 : i32
    %c0_i32_0 = arith.constant 0 : i32
    %c0_i32_1 = arith.constant 0 : i32
    return %c0_i32, %c0_i32_0 : i32, i32
  }
  func.func @transform_7(%arg0: i32, %arg1: memref<8xi32, #tpu.memory_space<smem>>) -> (i32, i32) {
    %c0_i32 = arith.constant 0 : i32
    %c0_i32_0 = arith.constant 0 : i32
    %c0_i32_1 = arith.constant 0 : i32
    return %c0_i32, %c0_i32_0 : i32, i32
  }
  func.func @transform_8(%arg0: i32, %arg1: memref<8xi32, #tpu.memory_space<smem>>) -> (i32, i32) {
    %c0_i32 = arith.constant 0 : i32
    %c0_i32_0 = arith.constant 0 : i32
    %c0_i32_1 = arith.constant 0 : i32
    return %c0_i32, %c0_i32_0 : i32, i32
  }
}

</mosaic_0001>

<llo_original>
// kernel: tpu_custom_call.1
$region0: #{tpu_custom_call.1}
  #allocation0 [shape = 'u32[]', space=smem, size = 0x4, offset = 0x4, fixed_abs, tag = 'smem constant byte address 0x4 - core index']
  #allocation1 [shape = 'u32[144,128]{1,0:T(1,128)}', space=vmem, size = 0x12000, scoped, tag = 'internal scratch']
  #allocation2 [shape = 's32[1]{0}', space=sflag, size = 0x4, scoped, tag = 'scoped memory for tpu_custom_call.1']
  #allocation3 [shape = 'u8[512]{0}', space=smem, size = 0x200, scoped, tag = 'prefetched SMEM operand 0']
  %s0 = inlined_call_operand.hbm [shape: s32[8], index: 0, kind: input, shape index: {}]
  %s1 = inlined_call_operand.hbm [shape: f32[64,128], index: 1, kind: input, shape index: {}]
  %s2 = inlined_call_operand.vmem [shape: f32[1,128], index: 2, kind: input, shape index: {}]
  %s3 = inlined_call_operand.vmem [shape: f32[1,128], index: 3, kind: input, shape index: {}]
  %s4 = inlined_call_operand.hbm [shape: f32[128,128], index: 4, kind: input, shape index: {}]
  %s5 = inlined_call_operand.vmem [shape: f32[1,128], index: 5, kind: input, shape index: {}]
  %s6 = inlined_call_operand.hbm [shape: f32[128,128], index: 6, kind: input, shape index: {}]
  %s7 = inlined_call_operand.vmem [shape: f32[1,128], index: 7, kind: input, shape index: {}]
  %s8 = inlined_call_operand.hbm [shape: f32[8,128], index: 8, kind: output, shape index: {0}]
  %s9 = inlined_call_operand.hbm [shape: f32[2,128], index: 9, kind: output, shape index: {1}]
  %10 = xla_tuple %s8, %s9
  %s11 = sld [smem:[#allocation0]]
  $region58: #{tpu_custom_call.1} parent=0
    _
  %s13 = ssub.s32 1, %s11
  %s14 = scalar_select 0, %s13, %s11
  %16 = dma.hbm_to_smem %s0, 16, [#allocation3], [#allocation2]
  %17 = dma.done [#allocation2], 16
  %18 = sfence
  $region1: #{tpu_custom_call.1} parent=0
    #allocation4 [shape = 'u8[32768]{0}', space=vmem, size = 0x8000, scoped, tag = 'input window, operand 1, single buffered']
    #allocation5 [shape = 's32[1]{0}', space=sflag, size = 0x4, scoped, tag = 'scoped memory for tpu_custom_call.1']
    #allocation6 [shape = 's32[1]{0}', space=sflag, size = 0x4, scoped, tag = 'scoped memory for tpu_custom_call.1']
    #allocation7 [shape = 'u8[65536]{0}', space=vmem, size = 0x10000, scoped, tag = 'input window, operand 4, single buffered']
    #allocation8 [shape = 's32[1]{0}', space=sflag, size = 0x4, scoped, tag = 'scoped memory for tpu_custom_call.1']
    #allocation9 [shape = 'u8[65536]{0}', space=vmem, size = 0x10000, scoped, tag = 'input window, operand 6, single buffered']
    #allocation10 [shape = 'u8[4096]{0}', space=vmem, size = 0x1000, scoped, tag = 'output window, operand 0, single buffered']
    #allocation11 [shape = 'u8[1024]{0}', space=vmem, size = 0x400, scoped, tag = 'output window, operand 1, single buffered']
    #allocation12 [shape = 's32[1]{0}', space=sflag, size = 0x4, scoped, tag = 'scoped memory for tpu_custom_call.1']
    %19 = vsyncpa [#allocation5], 0
    %20 = vsyncpa [#allocation8], 0
    %21 = vsyncpa [#allocation6], 0
    %22 = vsyncpa [#allocation12], 0
    // Predicated region
    $region2: #{tpu_custom_call.1} parent=1 // pred_check
      _
    $region3: #{tpu_custom_call.1} parent=1 // pred_check_branch
      %24 = sbr.rel (0) target = $region5
    $region4: #{tpu_custom_call.1} parent=1 // pred_region
      %s26 = ssub.s32 1024, 1024
      %27 = vsyncadd [#allocation5], %s26
      %s28 = sshll.u32 [#allocation4], 4
      %s29 = int_to_ptr.vmem [resolvable:$true] %s28
      %34 = dma.hbm_to_vmem [thread:$0]  %s1, 1024, %s29, [#allocation5], 128, 128, 8
    $region5: #{tpu_custom_call.1} parent=1 // pred_fallthru
      _
    // Predicated region
    $region6: #{tpu_custom_call.1} parent=1 // pred_check
      _
    $region7: #{tpu_custom_call.1} parent=1 // pred_check_branch
      %36 = sbr.rel (0) target = $region9
    $region8: #{tpu_custom_call.1} parent=1 // pred_region
      _
    $region9: #{tpu_custom_call.1} parent=1 // pred_fallthru
      _
    // Predicated region
    $region10: #{tpu_custom_call.1} parent=1 // pred_check
      _
    $region11: #{tpu_custom_call.1} parent=1 // pred_check_branch
      %38 = sbr.rel (0) target = $region13
    $region12: #{tpu_custom_call.1} parent=1 // pred_region
      _
    $region13: #{tpu_custom_call.1} parent=1 // pred_fallthru
      _
    // Predicated region
    $region14: #{tpu_custom_call.1} parent=1 // pred_check
      _
    $region15: #{tpu_custom_call.1} parent=1 // pred_check_branch
      %40 = sbr.rel (0) target = $region17
    $region16: #{tpu_custom_call.1} parent=1 // pred_region
      %s42 = ssub.s32 2048, 2048
      %43 = vsyncadd [#allocation8], %s42
      %s44 = sshll.u32 [#allocation7], 4
      %s45 = int_to_ptr.vmem [resolvable:$true] %s44
      %50 = dma.hbm_to_vmem [thread:$0]  %s4, 2048, %s45, [#allocation8], 128, 128, 8
    $region17: #{tpu_custom_call.1} parent=1 // pred_fallthru
      _
    // Predicated region
    $region18: #{tpu_custom_call.1} parent=1 // pred_check
      _
    $region19: #{tpu_custom_call.1} parent=1 // pred_check_branch
      %52 = sbr.rel (0) target = $region21
    $region20: #{tpu_custom_call.1} parent=1 // pred_region
      _
    $region21: #{tpu_custom_call.1} parent=1 // pred_fallthru
      _
    // Predicated region
    $region22: #{tpu_custom_call.1} parent=1 // pred_check
      _
    $region23: #{tpu_custom_call.1} parent=1 // pred_check_branch
      %54 = sbr.rel (0) target = $region25
    $region24: #{tpu_custom_call.1} parent=1 // pred_region
      %s56 = ssub.s32 2048, 2048
      %57 = vsyncadd [#allocation8], %s56
      %s58 = sshll.u32 [#allocation9], 4
      %s59 = int_to_ptr.vmem [resolvable:$true] %s58
      %64 = dma.hbm_to_vmem [thread:$0]  %s6, 2048, %s59, [#allocation8], 128, 128, 8
    $region25: #{tpu_custom_call.1} parent=1 // pred_fallthru
      _
    // Predicated region
    $region26: #{tpu_custom_call.1} parent=1 // pred_check
      _
    $region27: #{tpu_custom_call.1} parent=1 // pred_check_branch
      %66 = sbr.rel (0) target = $region29
    $region28: #{tpu_custom_call.1} parent=1 // pred_region
      _
    $region29: #{tpu_custom_call.1} parent=1 // pred_fallthru
      _
    // Predicated region
    $region30: #{tpu_custom_call.1} parent=1 // pred_check
      _
    $region31: #{tpu_custom_call.1} parent=1 // pred_check_branch
      %68 = sbr.rel (0) target = $region33
    $region32: #{tpu_custom_call.1} parent=1 // pred_region
      %69 = dma.done [#allocation5], 1024
    $region33: #{tpu_custom_call.1} parent=1 // pred_fallthru
      _
    // Predicated region
    $region34: #{tpu_custom_call.1} parent=1 // pred_check
      _
    $region35: #{tpu_custom_call.1} parent=1 // pred_check_branch
      %71 = sbr.rel (0) target = $region37
    $region36: #{tpu_custom_call.1} parent=1 // pred_region
      %72 = dma.done [#allocation8], 2048
    $region37: #{tpu_custom_call.1} parent=1 // pred_fallthru
      _
    // Predicated region
    $region38: #{tpu_custom_call.1} parent=1 // pred_check
      _
    $region39: #{tpu_custom_call.1} parent=1 // pred_check_branch
      %74 = sbr.rel (0) target = $region41
    $region40: #{tpu_custom_call.1} parent=1 // pred_region
      %75 = dma.done [#allocation8], 2048
    $region41: #{tpu_custom_call.1} parent=1 // pred_fallthru
      _
    %v76 = vlaneseq
    %v77 = vand.u32 %v76, 127
    %vm78 = vcmp.lt.s32.totalorder %v77, 32
    %v79 = vld [vmem:[%s2] sm:$0x1]
    %v80 = vld [vmem:[%s3] sm:$0x1]
    %s81 = sld [smem:[#allocation3]]
    %s82 = scalar_lea.vmem [#allocation4], %s81
    %v83 = vld [vmem:[%s82] sm:$0x1]
    %v84 = vmax.f32 %v83, 0.0
    %v85 = vsel %vm78, %v79, %v84
    %v86 = vld [vmem:[#allocation7] sm:$0xff]
    %v87 = vld [vmem:[#allocation7 + $0x8] sm:$0xff]
    %v88 = vld [vmem:[#allocation7 + $0x10] sm:$0xff]
    %v89 = vld [vmem:[#allocation7 + $0x18] sm:$0xff]
    %v90 = vld [vmem:[#allocation7 + $0x20] sm:$0xff]
    %v91 = vld [vmem:[#allocation7 + $0x28] sm:$0xff]
    %v92 = vld [vmem:[#allocation7 + $0x30] sm:$0xff]
    %v93 = vld [vmem:[#allocation7 + $0x38] sm:$0xff]
    %v94 = vld [vmem:[#allocation7 + $0x40] sm:$0xff]
    %v95 = vld [vmem:[#allocation7 + $0x48] sm:$0xff]
    %v96 = vld [vmem:[#allocation7 + $0x50] sm:$0xff]
    %v97 = vld [vmem:[#allocation7 + $0x58] sm:$0xff]
    %v98 = vld [vmem:[#allocation7 + $0x60] sm:$0xff]
    %v99 = vld [vmem:[#allocation7 + $0x68] sm:$0xff]
    %v100 = vld [vmem:[#allocation7 + $0x70] sm:$0xff]
    %v101 = vld [vmem:[#allocation7 + $0x78] sm:$0xff]
    %v102 = vld [vmem:[%s5] sm:$0x1]
    %103 = vmatprep.subr.mxu0 0.0
    %104 = vmatpush1.msra.mxu0 %v86
    %105 = vmatprep.subr.mxu0 0.0
    %106 = vmatpush1.msra.mxu0 %v87
    %107 = vmatprep.subr.mxu0 0.0
    %108 = vmatpush1.msra.mxu0 %v88
    %109 = vmatprep.subr.mxu0 0.0
    %110 = vmatpush1.msra.mxu0 %v89
    %111 = vmatprep.subr.mxu0 0.0
    %112 = vmatpush1.msra.mxu0 %v90
    %113 = vmatprep.subr.mxu0 0.0
    %114 = vmatpush1.msra.mxu0 %v91
    %115 = vmatprep.subr.mxu0 0.0
    %116 = vmatpush1.msra.mxu0 %v92
    %117 = vmatprep.subr.mxu0 0.0
    %118 = vmatpush1.msra.mxu0 %v93
    %119 = vmatprep.subr.mxu0 0.0
    %120 = vmatpush1.msra.mxu0 %v94
    %121 = vmatprep.subr.mxu0 0.0
    %122 = vmatpush1.msra.mxu0 %v95
    %123 = vmatprep.subr.mxu0 0.0
    %124 = vmatpush1.msra.mxu0 %v96
    %125 = vmatprep.subr.mxu0 0.0
    %126 = vmatpush1.msra.mxu0 %v97
    %127 = vmatprep.subr.mxu0 0.0
    %128 = vmatpush1.msra.mxu0 %v98
    %129 = vmatprep.subr.mxu0 0.0
    %130 = vmatpush1.msra.mxu0 %v99
    %131 = vmatprep.subr.mxu0 0.0
    %132 = vmatpush1.msra.mxu0 %v100
    %133 = vmatprep.subr.mxu0 0.0
    %134 = vmatpush1.msra.mxu0 %v101
    %135 = vmatprep.subr.mxu0 0.0
    %136 = vmatpush1.msra.mxu0 0.0
    %137 = vmatprep.subr.mxu0 0.0
    %138 = vmatpush1.msra.mxu0 0.0
    %139 = vmatprep.subr.mxu0 0.0
    %140 = vmatpush1.msra.mxu0 0.0
    %141 = vmatprep.subr.mxu0 0.0
    %142 = vmatpush1.msra.mxu0 0.0
    %143 = vmatprep.subr.mxu0 0.0
    %144 = vmatpush1.msra.mxu0 0.0
    %145 = vmatprep.subr.mxu0 0.0
    %146 = vmatpush1.msra.mxu0 0.0
    %147 = vmatprep.subr.mxu0 0.0
    %148 = vmatpush1.msra.mxu0 0.0
    %149 = vmatprep.subr.mxu0 0.0
    %150 = vmatpush1.msra.mxu0 0.0
    %151 = vmatprep.subr.mxu0 0.0
    %152 = vmatpush1.msra.mxu0 0.0
    %153 = vmatprep.subr.mxu0 0.0
    %154 = vmatpush1.msra.mxu0 0.0
    %155 = vmatprep.subr.mxu0 0.0
    %156 = vmatpush1.msra.mxu0 0.0
    %157 = vmatprep.subr.mxu0 0.0
    %158 = vmatpush1.msra.mxu0 0.0
    %159 = vmatprep.subr.mxu0 0.0
    %160 = vmatpush1.msra.mxu0 0.0
    %161 = vmatprep.subr.mxu0 0.0
    %162 = vmatpush1.msra.mxu0 0.0
    %163 = vmatprep.subr.mxu0 0.0
    %164 = vmatpush1.msra.mxu0 0.0
    %165 = vmatprep.subr.mxu0 0.0
    %166 = vmatpush1.msra.mxu0 0.0
    %167 = vmatprep.mubr.f32.mxu0 0.0
    %168 = vmatmul.mubr.f32.gmra.mrb[0].mxu0 %v85
    %v169 = vpop.f32.mrb[0].mxu0
    %v170 = vadd.f32 %v102, %v169
    %v171 = vpop.f32.mrb[0].mxu0
    %172 = vdwg.mxu0
    %v173 = vmul.f32 %v170, 0.5
    %v174 = vtanh.pop %v173
    %v175 = vadd.f32 %v174, 1.0
    %v176 = vmul.f32 %v175, 0.5
    %v177 = vtanh.pop %v170
    %178 = vrot.lane.b32.xlu0 %v176, 96
    %v179 = vpop.permute.xlu0 %178
    %180 = vrot.lane.b32.xlu0 %v177, 64
    %v181 = vpop.permute.xlu0 %180
    %182 = vrot.lane.b32.xlu0 %v176, 32
    %v183 = vpop.permute.xlu0 %182
    %v184 = vmul.f32 %v179, %v80
    %v185 = vmul.f32 %v176, %v181
    %v186 = vadd.f32 %v184, %v185
    %v187 = vtanh.pop %v186
    %v188 = vmul.f32 %v183, %v187
    %v189 = vld [vmem:[#allocation9] sm:$0xff]
    %v190 = vld [vmem:[#allocation9 + $0x8] sm:$0xff]
    %v191 = vld [vmem:[#allocation9 + $0x10] sm:$0xff]
    %v192 = vld [vmem:[#allocation9 + $0x18] sm:$0xff]
    %v193 = vld [vmem:[#allocation9 + $0x20] sm:$0xff]
    %v194 = vld [vmem:[#allocation9 + $0x28] sm:$0xff]
    %v195 = vld [vmem:[#allocation9 + $0x30] sm:$0xff]
    %v196 = vld [vmem:[#allocation9 + $0x38] sm:$0xff]
    %v197 = vld [vmem:[#allocation9 + $0x40] sm:$0xff]
    %v198 = vld [vmem:[#allocation9 + $0x48] sm:$0xff]
    %v199 = vld [vmem:[#allocation9 + $0x50] sm:$0xff]
    %v200 = vld [vmem:[#allocation9 + $0x58] sm:$0xff]
    %v201 = vld [vmem:[#allocation9 + $0x60] sm:$0xff]
    %v202 = vld [vmem:[#allocation9 + $0x68] sm:$0xff]
    %v203 = vld [vmem:[#allocation9 + $0x70] sm:$0xff]
    %v204 = vld [vmem:[#allocation9 + $0x78] sm:$0xff]
    %v205 = vld [vmem:[%s7] sm:$0x1]
    %206 = vmatprep.subr.mxu0 0.0
    %207 = vmatpush1.msra.mxu0 %v189
    %208 = vmatprep.subr.mxu0 0.0
    %209 = vmatpush1.msra.mxu0 %v190
    %210 = vmatprep.subr.mxu0 0.0
    %211 = vmatpush1.msra.mxu0 %v191
    %212 = vmatprep.subr.mxu0 0.0
    %213 = vmatpush1.msra.mxu0 %v192
    %214 = vmatprep.subr.mxu0 0.0
    %215 = vmatpush1.msra.mxu0 %v193
    %216 = vmatprep.subr.mxu0 0.0
    %217 = vmatpush1.msra.mxu0 %v194
    %218 = vmatprep.subr.mxu0 0.0
    %219 = vmatpush1.msra.mxu0 %v195
    %220 = vmatprep.subr.mxu0 0.0
    %221 = vmatpush1.msra.mxu0 %v196
    %222 = vmatprep.subr.mxu0 0.0
    %223 = vmatpush1.msra.mxu0 %v197
    %224 = vmatprep.subr.mxu0 0.0
    %225 = vmatpush1.msra.mxu0 %v198
    %226 = vmatprep.subr.mxu0 0.0
    %227 = vmatpush1.msra.mxu0 %v199
    %228 = vmatprep.subr.mxu0 0.0
    %229 = vmatpush1.msra.mxu0 %v200
    %230 = vmatprep.subr.mxu0 0.0
    %231 = vmatpush1.msra.mxu0 %v201
    %232 = vmatprep.subr.mxu0 0.0
    %233 = vmatpush1.msra.mxu0 %v202
    %234 = vmatprep.subr.mxu0 0.0
    %235 = vmatpush1.msra.mxu0 %v203
    %236 = vmatprep.subr.mxu0 0.0
    %237 = vmatpush1.msra.mxu0 %v204
    %238 = vmatprep.subr.mxu0 0.0
    %239 = vmatpush1.msra.mxu0 0.0
    %240 = vmatprep.subr.mxu0 0.0
    %241 = vmatpush1.msra.mxu0 0.0
    %242 = vmatprep.subr.mxu0 0.0
    %243 = vmatpush1.msra.mxu0 0.0
    %244 = vmatprep.subr.mxu0 0.0
    %245 = vmatpush1.msra.mxu0 0.0
    %246 = vmatprep.subr.mxu0 0.0
    %247 = vmatpush1.msra.mxu0 0.0
    %248 = vmatprep.subr.mxu0 0.0
    %249 = vmatpush1.msra.mxu0 0.0
    %250 = vmatprep.subr.mxu0 0.0
    %251 = vmatpush1.msra.mxu0 0.0
    %252 = vmatprep.subr.mxu0 0.0
    %253 = vmatpush1.msra.mxu0 0.0
    %254 = vmatprep.subr.mxu0 0.0
    %255 = vmatpush1.msra.mxu0 0.0
    %256 = vmatprep.subr.mxu0 0.0
    %257 = vmatpush1.msra.mxu0 0.0
    %258 = vmatprep.subr.mxu0 0.0
    %259 = vmatpush1.msra.mxu0 0.0
    %260 = vmatprep.subr.mxu0 0.0
    %261 = vmatpush1.msra.mxu0 0.0
    %262 = vmatprep.subr.mxu0 0.0
    %263 = vmatpush1.msra.mxu0 0.0
    %264 = vmatprep.subr.mxu0 0.0
    %265 = vmatpush1.msra.mxu0 0.0
    %266 = vmatprep.subr.mxu0 0.0
    %267 = vmatpush1.msra.mxu0 0.0
    %268 = vmatprep.subr.mxu0 0.0
    %269 = vmatpush1.msra.mxu0 0.0
    %270 = vmatprep.mubr.f32.mxu0 0.0
    %271 = vmatmul.mubr.f32.gmra.mrb[0].mxu0 %v188
    %v272 = vpop.f32.mrb[0].mxu0
    %v273 = vadd.f32 %v205, %v272
    %v274 = vpop.f32.mrb[0].mxu0
    %275 = vdwg.mxu0
    %276 = vst [vmem:[#allocation10] sm:$0x1] %v273
    %s277 = sld [smem:[#allocation3 + $0x1]]
    %s278 = scalar_lea.vmem [#allocation4], %s277
    %v279 = vld [vmem:[%s278] sm:$0x1]
    %v280 = vmax.f32 %v279, 0.0
    %v281 = vsel %vm78, %v188, %v280
    %v282 = vld [vmem:[#allocation7] sm:$0xff]
    %v283 = vld [vmem:[#allocation7 + $0x8] sm:$0xff]
    %v284 = vld [vmem:[#allocation7 + $0x10] sm:$0xff]
    %v285 = vld [vmem:[#allocation7 + $0x18] sm:$0xff]
    %v286 = vld [vmem:[#allocation7 + $0x20] sm:$0xff]
    %v287 = vld [vmem:[#allocation7 + $0x28] sm:$0xff]
    %v288 = vld [vmem:[#allocation7 + $0x30] sm:$0xff]
    %v289 = vld [vmem:[#allocation7 + $0x38] sm:$0xff]
    %v290 = vld [vmem:[#allocation7 + $0x40] sm:$0xff]
    %v291 = vld [vmem:[#allocation7 + $0x48] sm:$0xff]
    %v292 = vld [vmem:[#allocation7 + $0x50] sm:$0xff]
    %v293 = vld [vmem:[#allocation7 + $0x58] sm:$0xff]
    %v294 = vld [vmem:[#allocation7 + $0x60] sm:$0xff]
    %v295 = vld [vmem:[#allocation7 + $0x68] sm:$0xff]
    %v296 = vld [vmem:[#allocation7 + $0x70] sm:$0xff]
    %v297 = vld [vmem:[#allocation7 + $0x78] sm:$0xff]
    %v298 = vld [vmem:[%s5] sm:$0x1]
    %299 = vmatprep.subr.mxu0 0.0
    %300 = vmatpush1.msra.mxu0 %v282
    %301 = vmatprep.subr.mxu0 0.0
    %302 = vmatpush1.msra.mxu0 %v283
    %303 = vmatprep.subr.mxu0 0.0
    %304 = vmatpush1.msra.mxu0 %v284
    %305 = vmatprep.subr.mxu0 0.0
    %306 = vmatpush1.msra.mxu0 %v285
    %307 = vmatprep.subr.mxu0 0.0
    %308 = vmatpush1.msra.mxu0 %v286
    %309 = vmatprep.subr.mxu0 0.0
    %310 = vmatpush1.msra.mxu0 %v287
    %311 = vmatprep.subr.mxu0 0.0
    %312 = vmatpush1.msra.mxu0 %v288
    %313 = vmatprep.subr.mxu0 0.0
    %314 = vmatpush1.msra.mxu0 %v289
    %315 = vmatprep.subr.mxu0 0.0
    %316 = vmatpush1.msra.mxu0 %v290
    %317 = vmatprep.subr.mxu0 0.0
    %318 = vmatpush1.msra.mxu0 %v291
    %319 = vmatprep.subr.mxu0 0.0
    %320 = vmatpush1.msra.mxu0 %v292
    %321 = vmatprep.subr.mxu0 0.0
    %322 = vmatpush1.msra.mxu0 %v293
    %323 = vmatprep.subr.mxu0 0.0
    %324 = vmatpush1.msra.mxu0 %v294
    %325 = vmatprep.subr.mxu0 0.0
    %326 = vmatpush1.msra.mxu0 %v295
    %327 = vmatprep.subr.mxu0 0.0
    %328 = vmatpush1.msra.mxu0 %v296
    %329 = vmatprep.subr.mxu0 0.0
    %330 = vmatpush1.msra.mxu0 %v297
    %331 = vmatprep.subr.mxu0 0.0
    %332 = vmatpush1.msra.mxu0 0.0
    %333 = vmatprep.subr.mxu0 0.0
    %334 = vmatpush1.msra.mxu0 0.0
    %335 = vmatprep.subr.mxu0 0.0
    %336 = vmatpush1.msra.mxu0 0.0
    %337 = vmatprep.subr.mxu0 0.0
    %338 = vmatpush1.msra.mxu0 0.0
    %339 = vmatprep.subr.mxu0 0.0
    %340 = vmatpush1.msra.mxu0 0.0
    %341 = vmatprep.subr.mxu0 0.0
    %342 = vmatpush1.msra.mxu0 0.0
    %343 = vmatprep.subr.mxu0 0.0
    %344 = vmatpush1.msra.mxu0 0.0
    %345 = vmatprep.subr.mxu0 0.0
    %346 = vmatpush1.msra.mxu0 0.0
    %347 = vmatprep.subr.mxu0 0.0
    %348 = vmatpush1.msra.mxu0 0.0
    %349 = vmatprep.subr.mxu0 0.0
    %350 = vmatpush1.msra.mxu0 0.0
    %351 = vmatprep.subr.mxu0 0.0
    %352 = vmatpush1.msra.mxu0 0.0
    %353 = vmatprep.subr.mxu0 0.0
    %354 = vmatpush1.msra.mxu0 0.0
    %355 = vmatprep.subr.mxu0 0.0
    %356 = vmatpush1.msra.mxu0 0.0
    %357 = vmatprep.subr.mxu0 0.0
    %358 = vmatpush1.msra.mxu0 0.0
    %359 = vmatprep.subr.mxu0 0.0
    %360 = vmatpush1.msra.mxu0 0.0
    %361 = vmatprep.subr.mxu0 0.0
    %362 = vmatpush1.msra.mxu0 0.0
    %363 = vmatprep.mubr.f32.mxu0 0.0
    %364 = vmatmul.mubr.f32.gmra.mrb[0].mxu0 %v281
    %v365 = vpop.f32.mrb[0].mxu0
    %v366 = vadd.f32 %v298, %v365
    %v367 = vpop.f32.mrb[0].mxu0
    %368 = vdwg.mxu0
    %v369 = vmul.f32 %v366, 0.5
    %v370 = vtanh.pop %v369
    %v371 = vadd.f32 %v370, 1.0
    %v372 = vmul.f32 %v371, 0.5
    %v373 = vtanh.pop %v366
    %374 = vrot.lane.b32.xlu0 %v372, 96
    %v375 = vpop.permute.xlu0 %374
    %376 = vrot.lane.b32.xlu0 %v373, 64
    %v377 = vpop.permute.xlu0 %376
    %378 = vrot.lane.b32.xlu0 %v372, 32
    %v379 = vpop.permute.xlu0 %378
    %v380 = vmul.f32 %v375, %v186
    %v381 = vmul.f32 %v372, %v377
    %v382 = vadd.f32 %v380, %v381
    %v383 = vtanh.pop %v382
    %v384 = vmul.f32 %v379, %v383
    %v385 = vld [vmem:[#allocation9] sm:$0xff]
    %v386 = vld [vmem:[#allocation9 + $0x8] sm:$0xff]
    %v387 = vld [vmem:[#allocation9 + $0x10] sm:$0xff]
    %v388 = vld [vmem:[#allocation9 + $0x18] sm:$0xff]
    %v389 = vld [vmem:[#allocation9 + $0x20] sm:$0xff]
    %v390 = vld [vmem:[#allocation9 + $0x28] sm:$0xff]
    %v391 = vld [vmem:[#allocation9 + $0x30] sm:$0xff]
    %v392 = vld [vmem:[#allocation9 + $0x38] sm:$0xff]
    %v393 = vld [vmem:[#allocation9 + $0x40] sm:$0xff]
    %v394 = vld [vmem:[#allocation9 + $0x48] sm:$0xff]
    %v395 = vld [vmem:[#allocation9 + $0x50] sm:$0xff]
    %v396 = vld [vmem:[#allocation9 + $0x58] sm:$0xff]
    %v397 = vld [vmem:[#allocation9 + $0x60] sm:$0xff]
    %v398 = vld [vmem:[#allocation9 + $0x68] sm:$0xff]
    %v399 = vld [vmem:[#allocation9 + $0x70] sm:$0xff]
    %v400 = vld [vmem:[#allocation9 + $0x78] sm:$0xff]
    %v401 = vld [vmem:[%s7] sm:$0x1]
    %402 = vmatprep.subr.mxu0 0.0
    %403 = vmatpush1.msra.mxu0 %v385
    %404 = vmatprep.subr.mxu0 0.0
    %405 = vmatpush1.msra.mxu0 %v386
    %406 = vmatprep.subr.mxu0 0.0
    %407 = vmatpush1.msra.mxu0 %v387
    %408 = vmatprep.subr.mxu0 0.0
    %409 = vmatpush1.msra.mxu0 %v388
    %410 = vmatprep.subr.mxu0 0.0
    %411 = vmatpush1.msra.mxu0 %v389
    %412 = vmatprep.subr.mxu0 0.0
    %413 = vmatpush1.msra.mxu0 %v390
    %414 = vmatprep.subr.mxu0 0.0
    %415 = vmatpush1.msra.mxu0 %v391
    %416 = vmatprep.subr.mxu0 0.0
    %417 = vmatpush1.msra.mxu0 %v392
    %418 = vmatprep.subr.mxu0 0.0
    %419 = vmatpush1.msra.mxu0 %v393
    %420 = vmatprep.subr.mxu0 0.0
    %421 = vmatpush1.msra.mxu0 %v394
    %422 = vmatprep.subr.mxu0 0.0
    %423 = vmatpush1.msra.mxu0 %v395
    %424 = vmatprep.subr.mxu0 0.0
    %425 = vmatpush1.msra.mxu0 %v396
    %426 = vmatprep.subr.mxu0 0.0
    %427 = vmatpush1.msra.mxu0 %v397
    %428 = vmatprep.subr.mxu0 0.0
    %429 = vmatpush1.msra.mxu0 %v398
    %430 = vmatprep.subr.mxu0 0.0
    %431 = vmatpush1.msra.mxu0 %v399
    %432 = vmatprep.subr.mxu0 0.0
    %433 = vmatpush1.msra.mxu0 %v400
    %434 = vmatprep.subr.mxu0 0.0
    %435 = vmatpush1.msra.mxu0 0.0
    %436 = vmatprep.subr.mxu0 0.0
    %437 = vmatpush1.msra.mxu0 0.0
    %438 = vmatprep.subr.mxu0 0.0
    %439 = vmatpush1.msra.mxu0 0.0
    %440 = vmatprep.subr.mxu0 0.0
    %441 = vmatpush1.msra.mxu0 0.0
    %442 = vmatprep.subr.mxu0 0.0
    %443 = vmatpush1.msra.mxu0 0.0
    %444 = vmatprep.subr.mxu0 0.0
    %445 = vmatpush1.msra.mxu0 0.0
    %446 = vmatprep.subr.mxu0 0.0
    %447 = vmatpush1.msra.mxu0 0.0
    %448 = vmatprep.subr.mxu0 0.0
    %449 = vmatpush1.msra.mxu0 0.0
    %450 = vmatprep.subr.mxu0 0.0
    %451 = vmatpush1.msra.mxu0 0.0
    %452 = vmatprep.subr.mxu0 0.0
    %453 = vmatpush1.msra.mxu0 0.0
    %454 = vmatprep.subr.mxu0 0.0
    %455 = vmatpush1.msra.mxu0 0.0
    %456 = vmatprep.subr.mxu0 0.0
    %457 = vmatpush1.msra.mxu0 0.0
    %458 = vmatprep.subr.mxu0 0.0
    %459 = vmatpush1.msra.mxu0 0.0
    %460 = vmatprep.subr.mxu0 0.0
    %461 = vmatpush1.msra.mxu0 0.0
    %462 = vmatprep.subr.mxu0 0.0
    %463 = vmatpush1.msra.mxu0 0.0
    %464 = vmatprep.subr.mxu0 0.0
    %465 = vmatpush1.msra.mxu0 0.0
    %466 = vmatprep.mubr.f32.mxu0 0.0
    %467 = vmatmul.mubr.f32.gmra.mrb[0].mxu0 %v384
    %v468 = vpop.f32.mrb[0].mxu0
    %v469 = vadd.f32 %v401, %v468
    %v470 = vpop.f32.mrb[0].mxu0
    %471 = vdwg.mxu0
    %472 = vst [vmem:[#allocation10 + $0x1] sm:$0x1] %v469
    %s473 = sld [smem:[#allocation3 + $0x2]]
    %s474 = scalar_lea.vmem [#allocation4], %s473
    %v475 = vld [vmem:[%s474] sm:$0x1]
    %v476 = vmax.f32 %v475, 0.0
    %v477 = vsel %vm78, %v384, %v476
    %v478 = vld [vmem:[#allocation7] sm:$0xff]
    %v479 = vld [vmem:[#allocation7 + $0x8] sm:$0xff]
    %v480 = vld [vmem:[#allocation7 + $0x10] sm:$0xff]
    %v481 = vld [vmem:[#allocation7 + $0x18] sm:$0xff]
    %v482 = vld [vmem:[#allocation7 + $0x20] sm:$0xff]
    %v483 = vld [vmem:[#allocation7 + $0x28] sm:$0xff]
    %v484 = vld [vmem:[#allocation7 + $0x30] sm:$0xff]
    %v485 = vld [vmem:[#allocation7 + $0x38] sm:$0xff]
    %v486 = vld [vmem:[#allocation7 + $0x40] sm:$0xff]
    %v487 = vld [vmem:[#allocation7 + $0x48] sm:$0xff]
    %v488 = vld [vmem:[#allocation7 + $0x50] sm:$0xff]
    %v489 = vld [vmem:[#allocation7 + $0x58] sm:$0xff]
    %v490 = vld [vmem:[#allocation7 + $0x60] sm:$0xff]
    %v491 = vld [vmem:[#allocation7 + $0x68] sm:$0xff]
    %v492 = vld [vmem:[#allocation7 + $0x70] sm:$0xff]
    %v493 = vld [vmem:[#allocation7 + $0x78] sm:$0xff]
    %v494 = vld [vmem:[%s5] sm:$0x1]
    %495 = vmatprep.subr.mxu0 0.0
    %496 = vmatpush1.msra.mxu0 %v478
    %497 = vmatprep.subr.mxu0 0.0
    %498 = vmatpush1.msra.mxu0 %v479
    %499 = vmatprep.subr.mxu0 0.0
    %500 = vmatpush1.msra.mxu0 %v480
    %501 = vmatprep.subr.mxu0 0.0
    %502 = vmatpush1.msra.mxu0 %v481
    %503 = vmatprep.subr.mxu0 0.0
    %504 = vmatpush1.msra.mxu0 %v482
    %505 = vmatprep.subr.mxu0 0.0
    %506 = vmatpush1.msra.mxu0 %v483
    %507 = vmatprep.subr.mxu0 0.0
    %508 = vmatpush1.msra.mxu0 %v484
    %509 = vmatprep.subr.mxu0 0.0
    %510 = vmatpush1.msra.mxu0 %v485
    %511 = vmatprep.subr.mxu0 0.0
    %512 = vmatpush1.msra.mxu0 %v486
    %513 = vmatprep.subr.mxu0 0.0
    %514 = vmatpush1.msra.mxu0 %v487
    %515 = vmatprep.subr.mxu0 0.0
    %516 = vmatpush1.msra.mxu0 %v488
    %517 = vmatprep.subr.mxu0 0.0
    %518 = vmatpush1.msra.mxu0 %v489
    %519 = vmatprep.subr.mxu0 0.0
    %520 = vmatpush1.msra.mxu0 %v490
    %521 = vmatprep.subr.mxu0 0.0
    %522 = vmatpush1.msra.mxu0 %v491
    %523 = vmatprep.subr.mxu0 0.0
    %524 = vmatpush1.msra.mxu0 %v492
    %525 = vmatprep.subr.mxu0 0.0
    %526 = vmatpush1.msra.mxu0 %v493
    %527 = vmatprep.subr.mxu0 0.0
    %528 = vmatpush1.msra.mxu0 0.0
    %529 = vmatprep.subr.mxu0 0.0
    %530 = vmatpush1.msra.mxu0 0.0
    %531 = vmatprep.subr.mxu0 0.0
    %532 = vmatpush1.msra.mxu0 0.0
    %533 = vmatprep.subr.mxu0 0.0
    %534 = vmatpush1.msra.mxu0 0.0
    %535 = vmatprep.subr.mxu0 0.0
    %536 = vmatpush1.msra.mxu0 0.0
    %537 = vmatprep.subr.mxu0 0.0
    %538 = vmatpush1.msra.mxu0 0.0
    %539 = vmatprep.subr.mxu0 0.0
    %540 = vmatpush1.msra.mxu0 0.0
    %541 = vmatprep.subr.mxu0 0.0
    %542 = vmatpush1.msra.mxu0 0.0
    %543 = vmatprep.subr.mxu0 0.0
    %544 = vmatpush1.msra.mxu0 0.0
    %545 = vmatprep.subr.mxu0 0.0
    %546 = vmatpush1.msra.mxu0 0.0
    %547 = vmatprep.subr.mxu0 0.0
    %548 = vmatpush1.msra.mxu0 0.0
    %549 = vmatprep.subr.mxu0 0.0
    %550 = vmatpush1.msra.mxu0 0.0
    %551 = vmatprep.subr.mxu0 0.0
    %552 = vmatpush1.msra.mxu0 0.0
    %553 = vmatprep.subr.mxu0 0.0
    %554 = vmatpush1.msra.mxu0 0.0
    %555 = vmatprep.subr.mxu0 0.0
    %556 = vmatpush1.msra.mxu0 0.0
    %557 = vmatprep.subr.mxu0 0.0
    %558 = vmatpush1.msra.mxu0 0.0
    %559 = vmatprep.mubr.f32.mxu0 0.0
    %560 = vmatmul.mubr.f32.gmra.mrb[0].mxu0 %v477
    %v561 = vpop.f32.mrb[0].mxu0
    %v562 = vadd.f32 %v494, %v561
    %v563 = vpop.f32.mrb[0].mxu0
    %564 = vdwg.mxu0
    %v565 = vmul.f32 %v562, 0.5
    %v566 = vtanh.pop %v565
    %v567 = vadd.f32 %v566, 1.0
    %v568 = vmul.f32 %v567, 0.5
    %v569 = vtanh.pop %v562
    %570 = vrot.lane.b32.xlu0 %v568, 96
    %v571 = vpop.permute.xlu0 %570
    %572 = vrot.lane.b32.xlu0 %v569, 64
    %v573 = vpop.permute.xlu0 %572
    %574 = vrot.lane.b32.xlu0 %v568, 32
    %v575 = vpop.permute.xlu0 %574
    %v576 = vmul.f32 %v571, %v382
    %v577 = vmul.f32 %v568, %v573
    %v578 = vadd.f32 %v576, %v577
    %v579 = vtanh.pop %v578
    %v580 = vmul.f32 %v575, %v579
    %v581 = vld [vmem:[#allocation9] sm:$0xff]
    %v582 = vld [vmem:[#allocation9 + $0x8] sm:$0xff]
    %v583 = vld [vmem:[#allocation9 + $0x10] sm:$0xff]
    %v584 = vld [vmem:[#allocation9 + $0x18] sm:$0xff]
    %v585 = vld [vmem:[#allocation9 + $0x20] sm:$0xff]
    %v586 = vld [vmem:[#allocation9 + $0x28] sm:$0xff]
    %v587 = vld [vmem:[#allocation9 + $0x30] sm:$0xff]
    %v588 = vld [vmem:[#allocation9 + $0x38] sm:$0xff]
    %v589 = vld [vmem:[#allocation9 + $0x40] sm:$0xff]
    %v590 = vld [vmem:[#allocation9 + $0x48] sm:$0xff]
    %v591 = vld [vmem:[#allocation9 + $0x50] sm:$0xff]
    %v592 = vld [vmem:[#allocation9 + $0x58] sm:$0xff]
    %v593 = vld [vmem:[#allocation9 + $0x60] sm:$0xff]
    %v594 = vld [vmem:[#allocation9 + $0x68] sm:$0xff]
    %v595 = vld [vmem:[#allocation9 + $0x70] sm:$0xff]
    %v596 = vld [vmem:[#allocation9 + $0x78] sm:$0xff]
    %v597 = vld [vmem:[%s7] sm:$0x1]
    %598 = vmatprep.subr.mxu0 0.0
    %599 = vmatpush1.msra.mxu0 %v581
    %600 = vmatprep.subr.mxu0 0.0
    %601 = vmatpush1.msra.mxu0 %v582
    %602 = vmatprep.subr.mxu0 0.0
    %603 = vmatpush1.msra.mxu0 %v583
    %604 = vmatprep.subr.mxu0 0.0
    %605 = vmatpush1.msra.mxu0 %v584
    %606 = vmatprep.subr.mxu0 0.0
    %607 = vmatpush1.msra.mxu0 %v585
    %608 = vmatprep.subr.mxu0 0.0
    %609 = vmatpush1.msra.mxu0 %v586
    %610 = vmatprep.subr.mxu0 0.0
    %611 = vmatpush1.msra.mxu0 %v587
    %612 = vmatprep.subr.mxu0 0.0
    %613 = vmatpush1.msra.mxu0 %v588
    %614 = vmatprep.subr.mxu0 0.0
    %615 = vmatpush1.msra.mxu0 %v589
    %616 = vmatprep.subr.mxu0 0.0
    %617 = vmatpush1.msra.mxu0 %v590
    %618 = vmatprep.subr.mxu0 0.0
    %619 = vmatpush1.msra.mxu0 %v591
    %620 = vmatprep.subr.mxu0 0.0
    %621 = vmatpush1.msra.mxu0 %v592
    %622 = vmatprep.subr.mxu0 0.0
    %623 = vmatpush1.msra.mxu0 %v593
    %624 = vmatprep.subr.mxu0 0.0
    %625 = vmatpush1.msra.mxu0 %v594
    %626 = vmatprep.subr.mxu0 0.0
    %627 = vmatpush1.msra.mxu0 %v595
    %628 = vmatprep.subr.mxu0 0.0
    %629 = vmatpush1.msra.mxu0 %v596
    %630 = vmatprep.subr.mxu0 0.0
    %631 = vmatpush1.msra.mxu0 0.0
    %632 = vmatprep.subr.mxu0 0.0
    %633 = vmatpush1.msra.mxu0 0.0
    %634 = vmatprep.subr.mxu0 0.0
    %635 = vmatpush1.msra.mxu0 0.0
    %636 = vmatprep.subr.mxu0 0.0
    %637 = vmatpush1.msra.mxu0 0.0
    %638 = vmatprep.subr.mxu0 0.0
    %639 = vmatpush1.msra.mxu0 0.0
    %640 = vmatprep.subr.mxu0 0.0
    %641 = vmatpush1.msra.mxu0 0.0
    %642 = vmatprep.subr.mxu0 0.0
    %643 = vmatpush1.msra.mxu0 0.0
    %644 = vmatprep.subr.mxu0 0.0
    %645 = vmatpush1.msra.mxu0 0.0
    %646 = vmatprep.subr.mxu0 0.0
    %647 = vmatpush1.msra.mxu0 0.0
    %648 = vmatprep.subr.mxu0 0.0
    %649 = vmatpush1.msra.mxu0 0.0
    %650 = vmatprep.subr.mxu0 0.0
    %651 = vmatpush1.msra.mxu0 0.0
    %652 = vmatprep.subr.mxu0 0.0
    %653 = vmatpush1.msra.mxu0 0.0
    %654 = vmatprep.subr.mxu0 0.0
    %655 = vmatpush1.msra.mxu0 0.0
    %656 = vmatprep.subr.mxu0 0.0
    %657 = vmatpush1.msra.mxu0 0.0
    %658 = vmatprep.subr.mxu0 0.0
    %659 = vmatpush1.msra.mxu0 0.0
    %660 = vmatprep.subr.mxu0 0.0
    %661 = vmatpush1.msra.mxu0 0.0
    %662 = vmatprep.mubr.f32.mxu0 0.0
    %663 = vmatmul.mubr.f32.gmra.mrb[0].mxu0 %v580
    %v664 = vpop.f32.mrb[0].mxu0
    %v665 = vadd.f32 %v597, %v664
    %v666 = vpop.f32.mrb[0].mxu0
    %667 = vdwg.mxu0
    %668 = vst [vmem:[#allocation10 + $0x2] sm:$0x1] %v665
    %s669 = sld [smem:[#allocation3 + $0x3]]
    %s670 = scalar_lea.vmem [#allocation4], %s669
    %v671 = vld [vmem:[%s670] sm:$0x1]
    %v672 = vmax.f32 %v671, 0.0
    %v673 = vsel %vm78, %v580, %v672
    %v674 = vld [vmem:[#allocation7] sm:$0xff]
    %v675 = vld [vmem:[#allocation7 + $0x8] sm:$0xff]
    %v676 = vld [vmem:[#allocation7 + $0x10] sm:$0xff]
    %v677 = vld [vmem:[#allocation7 + $0x18] sm:$0xff]
    %v678 = vld [vmem:[#allocation7 + $0x20] sm:$0xff]
    %v679 = vld [vmem:[#allocation7 + $0x28] sm:$0xff]
    %v680 = vld [vmem:[#allocation7 + $0x30] sm:$0xff]
    %v681 = vld [vmem:[#allocation7 + $0x38] sm:$0xff]
    %v682 = vld [vmem:[#allocation7 + $0x40] sm:$0xff]
    %v683 = vld [vmem:[#allocation7 + $0x48] sm:$0xff]
    %v684 = vld [vmem:[#allocation7 + $0x50] sm:$0xff]
    %v685 = vld [vmem:[#allocation7 + $0x58] sm:$0xff]
    %v686 = vld [vmem:[#allocation7 + $0x60] sm:$0xff]
    %v687 = vld [vmem:[#allocation7 + $0x68] sm:$0xff]
    %v688 = vld [vmem:[#allocation7 + $0x70] sm:$0xff]
    %v689 = vld [vmem:[#allocation7 + $0x78] sm:$0xff]
    %v690 = vld [vmem:[%s5] sm:$0x1]
    %691 = vmatprep.subr.mxu0 0.0
    %692 = vmatpush1.msra.mxu0 %v674
    %693 = vmatprep.subr.mxu0 0.0
    %694 = vmatpush1.msra.mxu0 %v675
    %695 = vmatprep.subr.mxu0 0.0
    %696 = vmatpush1.msra.mxu0 %v676
    %697 = vmatprep.subr.mxu0 0.0
    %698 = vmatpush1.msra.mxu0 %v677
    %699 = vmatprep.subr.mxu0 0.0
    %700 = vmatpush1.msra.mxu0 %v678
    %701 = vmatprep.subr.mxu0 0.0
    %702 = vmatpush1.msra.mxu0 %v679
    %703 = vmatprep.subr.mxu0 0.0
    %704 = vmatpush1.msra.mxu0 %v680
    %705 = vmatprep.subr.mxu0 0.0
    %706 = vmatpush1.msra.mxu0 %v681
    %707 = vmatprep.subr.mxu0 0.0
    %708 = vmatpush1.msra.mxu0 %v682
    %709 = vmatprep.subr.mxu0 0.0
    %710 = vmatpush1.msra.mxu0 %v683
    %711 = vmatprep.subr.mxu0 0.0
    %712 = vmatpush1.msra.mxu0 %v684
    %713 = vmatprep.subr.mxu0 0.0
    %714 = vmatpush1.msra.mxu0 %v685
    %715 = vmatprep.subr.mxu0 0.0
    %716 = vmatpush1.msra.mxu0 %v686
    %717 = vmatprep.subr.mxu0 0.0
    %718 = vmatpush1.msra.mxu0 %v687
    %719 = vmatprep.subr.mxu0 0.0
    %720 = vmatpush1.msra.mxu0 %v688
    %721 = vmatprep.subr.mxu0 0.0
    %722 = vmatpush1.msra.mxu0 %v689
    %723 = vmatprep.subr.mxu0 0.0
    %724 = vmatpush1.msra.mxu0 0.0
    %725 = vmatprep.subr.mxu0 0.0
    %726 = vmatpush1.msra.mxu0 0.0
    %727 = vmatprep.subr.mxu0 0.0
    %728 = vmatpush1.msra.mxu0 0.0
    %729 = vmatprep.subr.mxu0 0.0
    %730 = vmatpush1.msra.mxu0 0.0
    %731 = vmatprep.subr.mxu0 0.0
    %732 = vmatpush1.msra.mxu0 0.0
    %733 = vmatprep.subr.mxu0 0.0
    %734 = vmatpush1.msra.mxu0 0.0
    %735 = vmatprep.subr.mxu0 0.0
    %736 = vmatpush1.msra.mxu0 0.0
    %737 = vmatprep.subr.mxu0 0.0
    %738 = vmatpush1.msra.mxu0 0.0
    %739 = vmatprep.subr.mxu0 0.0
    %740 = vmatpush1.msra.mxu0 0.0
    %741 = vmatprep.subr.mxu0 0.0
    %742 = vmatpush1.msra.mxu0 0.0
    %743 = vmatprep.subr.mxu0 0.0
    %744 = vmatpush1.msra.mxu0 0.0
    %745 = vmatprep.subr.mxu0 0.0
    %746 = vmatpush1.msra.mxu0 0.0
    %747 = vmatprep.subr.mxu0 0.0
    %748 = vmatpush1.msra.mxu0 0.0
    %749 = vmatprep.subr.mxu0 0.0
    %750 = vmatpush1.msra.mxu0 0.0
    %751 = vmatprep.subr.mxu0 0.0
    %752 = vmatpush1.msra.mxu0 0.0
    %753 = vmatprep.subr.mxu0 0.0
    %754 = vmatpush1.msra.mxu0 0.0
    %755 = vmatprep.mubr.f32.mxu0 0.0
    %756 = vmatmul.mubr.f32.gmra.mrb[0].mxu0 %v673
    %v757 = vpop.f32.mrb[0].mxu0
    %v758 = vadd.f32 %v690, %v757
    %v759 = vpop.f32.mrb[0].mxu0
    %760 = vdwg.mxu0
    %v761 = vmul.f32 %v758, 0.5
    %v762 = vtanh.pop %v761
    %v763 = vadd.f32 %v762, 1.0
    %v764 = vmul.f32 %v763, 0.5
    %v765 = vtanh.pop %v758
    %766 = vrot.lane.b32.xlu0 %v764, 96
    %v767 = vpop.permute.xlu0 %766
    %768 = vrot.lane.b32.xlu0 %v765, 64
    %v769 = vpop.permute.xlu0 %768
    %770 = vrot.lane.b32.xlu0 %v764, 32
    %v771 = vpop.permute.xlu0 %770
    %v772 = vmul.f32 %v767, %v578
    %v773 = vmul.f32 %v764, %v769
    %v774 = vadd.f32 %v772, %v773
    %v775 = vtanh.pop %v774
    %v776 = vmul.f32 %v771, %v775
    %v777 = vld [vmem:[#allocation9] sm:$0xff]
    %v778 = vld [vmem:[#allocation9 + $0x8] sm:$0xff]
    %v779 = vld [vmem:[#allocation9 + $0x10] sm:$0xff]
    %v780 = vld [vmem:[#allocation9 + $0x18] sm:$0xff]
    %v781 = vld [vmem:[#allocation9 + $0x20] sm:$0xff]
    %v782 = vld [vmem:[#allocation9 + $0x28] sm:$0xff]
    %v783 = vld [vmem:[#allocation9 + $0x30] sm:$0xff]
    %v784 = vld [vmem:[#allocation9 + $0x38] sm:$0xff]
    %v785 = vld [vmem:[#allocation9 + $0x40] sm:$0xff]
    %v786 = vld [vmem:[#allocation9 + $0x48] sm:$0xff]
    %v787 = vld [vmem:[#allocation9 + $0x50] sm:$0xff]
    %v788 = vld [vmem:[#allocation9 + $0x58] sm:$0xff]
    %v789 = vld [vmem:[#allocation9 + $0x60] sm:$0xff]
    %v790 = vld [vmem:[#allocation9 + $0x68] sm:$0xff]
    %v791 = vld [vmem:[#allocation9 + $0x70] sm:$0xff]
    %v792 = vld [vmem:[#allocation9 + $0x78] sm:$0xff]
    %v793 = vld [vmem:[%s7] sm:$0x1]
    %794 = vmatprep.subr.mxu0 0.0
    %795 = vmatpush1.msra.mxu0 %v777
    %796 = vmatprep.subr.mxu0 0.0
    %797 = vmatpush1.msra.mxu0 %v778
    %798 = vmatprep.subr.mxu0 0.0
    %799 = vmatpush1.msra.mxu0 %v779
    %800 = vmatprep.subr.mxu0 0.0
    %801 = vmatpush1.msra.mxu0 %v780
    %802 = vmatprep.subr.mxu0 0.0
    %803 = vmatpush1.msra.mxu0 %v781
    %804 = vmatprep.subr.mxu0 0.0
    %805 = vmatpush1.msra.mxu0 %v782
    %806 = vmatprep.subr.mxu0 0.0
    %807 = vmatpush1.msra.mxu0 %v783
    %808 = vmatprep.subr.mxu0 0.0
    %809 = vmatpush1.msra.mxu0 %v784
    %810 = vmatprep.subr.mxu0 0.0
    %811 = vmatpush1.msra.mxu0 %v785
    %812 = vmatprep.subr.mxu0 0.0
    %813 = vmatpush1.msra.mxu0 %v786
    %814 = vmatprep.subr.mxu0 0.0
    %815 = vmatpush1.msra.mxu0 %v787
    %816 = vmatprep.subr.mxu0 0.0
    %817 = vmatpush1.msra.mxu0 %v788
    %818 = vmatprep.subr.mxu0 0.0
    %819 = vmatpush1.msra.mxu0 %v789
    %820 = vmatprep.subr.mxu0 0.0
    %821 = vmatpush1.msra.mxu0 %v790
    %822 = vmatprep.subr.mxu0 0.0
    %823 = vmatpush1.msra.mxu0 %v791
    %824 = vmatprep.subr.mxu0 0.0
    %825 = vmatpush1.msra.mxu0 %v792
    %826 = vmatprep.subr.mxu0 0.0
    %827 = vmatpush1.msra.mxu0 0.0
    %828 = vmatprep.subr.mxu0 0.0
    %829 = vmatpush1.msra.mxu0 0.0
    %830 = vmatprep.subr.mxu0 0.0
    %831 = vmatpush1.msra.mxu0 0.0
    %832 = vmatprep.subr.mxu0 0.0
    %833 = vmatpush1.msra.mxu0 0.0
    %834 = vmatprep.subr.mxu0 0.0
    %835 = vmatpush1.msra.mxu0 0.0
    %836 = vmatprep.subr.mxu0 0.0
    %837 = vmatpush1.msra.mxu0 0.0
    %838 = vmatprep.subr.mxu0 0.0
    %839 = vmatpush1.msra.mxu0 0.0
    %840 = vmatprep.subr.mxu0 0.0
    %841 = vmatpush1.msra.mxu0 0.0
    %842 = vmatprep.subr.mxu0 0.0
    %843 = vmatpush1.msra.mxu0 0.0
    %844 = vmatprep.subr.mxu0 0.0
    %845 = vmatpush1.msra.mxu0 0.0
    %846 = vmatprep.subr.mxu0 0.0
    %847 = vmatpush1.msra.mxu0 0.0
    %848 = vmatprep.subr.mxu0 0.0
    %849 = vmatpush1.msra.mxu0 0.0
    %850 = vmatprep.subr.mxu0 0.0
    %851 = vmatpush1.msra.mxu0 0.0
    %852 = vmatprep.subr.mxu0 0.0
    %853 = vmatpush1.msra.mxu0 0.0
    %854 = vmatprep.subr.mxu0 0.0
    %855 = vmatpush1.msra.mxu0 0.0
    %856 = vmatprep.subr.mxu0 0.0
    %857 = vmatpush1.msra.mxu0 0.0
    %858 = vmatprep.mubr.f32.mxu0 0.0
    %859 = vmatmul.mubr.f32.gmra.mrb[0].mxu0 %v776
    %v860 = vpop.f32.mrb[0].mxu0
    %v861 = vadd.f32 %v793, %v860
    %v862 = vpop.f32.mrb[0].mxu0
    %863 = vdwg.mxu0
    %864 = vst [vmem:[#allocation10 + $0x3] sm:$0x1] %v861
    %s865 = sld [smem:[#allocation3 + $0x4]]
    %s866 = scalar_lea.vmem [#allocation4], %s865
    %v867 = vld [vmem:[%s866] sm:$0x1]
    %v868 = vmax.f32 %v867, 0.0
    %v869 = vsel %vm78, %v776, %v868
    %v870 = vld [vmem:[#allocation7] sm:$0xff]
    %v871 = vld [vmem:[#allocation7 + $0x8] sm:$0xff]
    %v872 = vld [vmem:[#allocation7 + $0x10] sm:$0xff]
    %v873 = vld [vmem:[#allocation7 + $0x18] sm:$0xff]
    %v874 = vld [vmem:[#allocation7 + $0x20] sm:$0xff]
    %v875 = vld [vmem:[#allocation7 + $0x28] sm:$0xff]
    %v876 = vld [vmem:[#allocation7 + $0x30] sm:$0xff]
    %v877 = vld [vmem:[#allocation7 + $0x38] sm:$0xff]
    %v878 = vld [vmem:[#allocation7 + $0x40] sm:$0xff]
    %v879 = vld [vmem:[#allocation7 + $0x48] sm:$0xff]
    %v880 = vld [vmem:[#allocation7 + $0x50] sm:$0xff]
    %v881 = vld [vmem:[#allocation7 + $0x58] sm:$0xff]
    %v882 = vld [vmem:[#allocation7 + $0x60] sm:$0xff]
    %v883 = vld [vmem:[#allocation7 + $0x68] sm:$0xff]
    %v884 = vld [vmem:[#allocation7 + $0x70] sm:$0xff]
    %v885 = vld [vmem:[#allocation7 + $0x78] sm:$0xff]
    %v886 = vld [vmem:[%s5] sm:$0x1]
    %887 = vmatprep.subr.mxu0 0.0
    %888 = vmatpush1.msra.mxu0 %v870
    %889 = vmatprep.subr.mxu0 0.0
    %890 = vmatpush1.msra.mxu0 %v871
    %891 = vmatprep.subr.mxu0 0.0
    %892 = vmatpush1.msra.mxu0 %v872
    %893 = vmatprep.subr.mxu0 0.0
    %894 = vmatpush1.msra.mxu0 %v873
    %895 = vmatprep.subr.mxu0 0.0
    %896 = vmatpush1.msra.mxu0 %v874
    %897 = vmatprep.subr.mxu0 0.0
    %898 = vmatpush1.msra.mxu0 %v875
    %899 = vmatprep.subr.mxu0 0.0
    %900 = vmatpush1.msra.mxu0 %v876
    %901 = vmatprep.subr.mxu0 0.0
    %902 = vmatpush1.msra.mxu0 %v877
    %903 = vmatprep.subr.mxu0 0.0
    %904 = vmatpush1.msra.mxu0 %v878
    %905 = vmatprep.subr.mxu0 0.0
    %906 = vmatpush1.msra.mxu0 %v879
    %907 = vmatprep.subr.mxu0 0.0
    %908 = vmatpush1.msra.mxu0 %v880
    %909 = vmatprep.subr.mxu0 0.0
    %910 = vmatpush1.msra.mxu0 %v881
    %911 = vmatprep.subr.mxu0 0.0
    %912 = vmatpush1.msra.mxu0 %v882
    %913 = vmatprep.subr.mxu0 0.0
    %914 = vmatpush1.msra.mxu0 %v883
    %915 = vmatprep.subr.mxu0 0.0
    %916 = vmatpush1.msra.mxu0 %v884
    %917 = vmatprep.subr.mxu0 0.0
    %918 = vmatpush1.msra.mxu0 %v885
    %919 = vmatprep.subr.mxu0 0.0
    %920 = vmatpush1.msra.mxu0 0.0
    %921 = vmatprep.subr.mxu0 0.0
    %922 = vmatpush1.msra.mxu0 0.0
    %923 = vmatprep.subr.mxu0 0.0
    %924 = vmatpush1.msra.mxu0 0.0
    %925 = vmatprep.subr.mxu0 0.0
    %926 = vmatpush1.msra.mxu0 0.0
    %927 = vmatprep.subr.mxu0 0.0
    %928 = vmatpush1.msra.mxu0 0.0
    %929 = vmatprep.subr.mxu0 0.0
    %930 = vmatpush1.msra.mxu0 0.0
    %931 = vmatprep.subr.mxu0 0.0
    %932 = vmatpush1.msra.mxu0 0.0
    %933 = vmatprep.subr.mxu0 0.0
    %934 = vmatpush1.msra.mxu0 0.0
    %935 = vmatprep.subr.mxu0 0.0
    %936 = vmatpush1.msra.mxu0 0.0
    %937 = vmatprep.subr.mxu0 0.0
    %938 = vmatpush1.msra.mxu0 0.0
    %939 = vmatprep.subr.mxu0 0.0
    %940 = vmatpush1.msra.mxu0 0.0
    %941 = vmatprep.subr.mxu0 0.0
    %942 = vmatpush1.msra.mxu0 0.0
    %943 = vmatprep.subr.mxu0 0.0
    %944 = vmatpush1.msra.mxu0 0.0
    %945 = vmatprep.subr.mxu0 0.0
    %946 = vmatpush1.msra.mxu0 0.0
    %947 = vmatprep.subr.mxu0 0.0
    %948 = vmatpush1.msra.mxu0 0.0
    %949 = vmatprep.subr.mxu0 0.0
    %950 = vmatpush1.msra.mxu0 0.0
    %951 = vmatprep.mubr.f32.mxu0 0.0
    %952 = vmatmul.mubr.f32.gmra.mrb[0].mxu0 %v869
    %v953 = vpop.f32.mrb[0].mxu0
    %v954 = vadd.f32 %v886, %v953
    %v955 = vpop.f32.mrb[0].mxu0
    %956 = vdwg.mxu0
    %v957 = vmul.f32 %v954, 0.5
    %v958 = vtanh.pop %v957
    %v959 = vadd.f32 %v958, 1.0
    %v960 = vmul.f32 %v959, 0.5
    %v961 = vtanh.pop %v954
    %962 = vrot.lane.b32.xlu0 %v960, 96
    %v963 = vpop.permute.xlu0 %962
    %964 = vrot.lane.b32.xlu0 %v961, 64
    %v965 = vpop.permute.xlu0 %964
    %966 = vrot.lane.b32.xlu0 %v960, 32
    %v967 = vpop.permute.xlu0 %966
    %v968 = vmul.f32 %v963, %v774
    %v969 = vmul.f32 %v960, %v965
    %v970 = vadd.f32 %v968, %v969
    %v971 = vtanh.pop %v970
    %v972 = vmul.f32 %v967, %v971
    %v973 = vld [vmem:[#allocation9] sm:$0xff]
    %v974 = vld [vmem:[#allocation9 + $0x8] sm:$0xff]
    %v975 = vld [vmem:[#allocation9 + $0x10] sm:$0xff]
    %v976 = vld [vmem:[#allocation9 + $0x18] sm:$0xff]
    %v977 = vld [vmem:[#allocation9 + $0x20] sm:$0xff]
    %v978 = vld [vmem:[#allocation9 + $0x28] sm:$0xff]
    %v979 = vld [vmem:[#allocation9 + $0x30] sm:$0xff]
    %v980 = vld [vmem:[#allocation9 + $0x38] sm:$0xff]
    %v981 = vld [vmem:[#allocation9 + $0x40] sm:$0xff]
    %v982 = vld [vmem:[#allocation9 + $0x48] sm:$0xff]
    %v983 = vld [vmem:[#allocation9 + $0x50] sm:$0xff]
    %v984 = vld [vmem:[#allocation9 + $0x58] sm:$0xff]
    %v985 = vld [vmem:[#allocation9 + $0x60] sm:$0xff]
    %v986 = vld [vmem:[#allocation9 + $0x68] sm:$0xff]
    %v987 = vld [vmem:[#allocation9 + $0x70] sm:$0xff]
    %v988 = vld [vmem:[#allocation9 + $0x78] sm:$0xff]
    %v989 = vld [vmem:[%s7] sm:$0x1]
    %990 = vmatprep.subr.mxu0 0.0
    %991 = vmatpush1.msra.mxu0 %v973
    %992 = vmatprep.subr.mxu0 0.0
    %993 = vmatpush1.msra.mxu0 %v974
    %994 = vmatprep.subr.mxu0 0.0
    %995 = vmatpush1.msra.mxu0 %v975
    %996 = vmatprep.subr.mxu0 0.0
    %997 = vmatpush1.msra.mxu0 %v976
    %998 = vmatprep.subr.mxu0 0.0
    %999 = vmatpush1.msra.mxu0 %v977
    %1000 = vmatprep.subr.mxu0 0.0
    %1001 = vmatpush1.msra.mxu0 %v978
    %1002 = vmatprep.subr.mxu0 0.0
    %1003 = vmatpush1.msra.mxu0 %v979
    %1004 = vmatprep.subr.mxu0 0.0
    %1005 = vmatpush1.msra.mxu0 %v980
    %1006 = vmatprep.subr.mxu0 0.0
    %1007 = vmatpush1.msra.mxu0 %v981
    %1008 = vmatprep.subr.mxu0 0.0
    %1009 = vmatpush1.msra.mxu0 %v982
    %1010 = vmatprep.subr.mxu0 0.0
    %1011 = vmatpush1.msra.mxu0 %v983
    %1012 = vmatprep.subr.mxu0 0.0
    %1013 = vmatpush1.msra.mxu0 %v984
    %1014 = vmatprep.subr.mxu0 0.0
    %1015 = vmatpush1.msra.mxu0 %v985
    %1016 = vmatprep.subr.mxu0 0.0
    %1017 = vmatpush1.msra.mxu0 %v986
    %1018 = vmatprep.subr.mxu0 0.0
    %1019 = vmatpush1.msra.mxu0 %v987
    %1020 = vmatprep.subr.mxu0 0.0
    %1021 = vmatpush1.msra.mxu0 %v988
    %1022 = vmatprep.subr.mxu0 0.0
    %1023 = vmatpush1.msra.mxu0 0.0
    %1024 = vmatprep.subr.mxu0 0.0
    %1025 = vmatpush1.msra.mxu0 0.0
    %1026 = vmatprep.subr.mxu0 0.0
    %1027 = vmatpush1.msra.mxu0 0.0
    %1028 = vmatprep.subr.mxu0 0.0
    %1029 = vmatpush1.msra.mxu0 0.0
    %1030 = vmatprep.subr.mxu0 0.0
    %1031 = vmatpush1.msra.mxu0 0.0
    %1032 = vmatprep.subr.mxu0 0.0
    %1033 = vmatpush1.msra.mxu0 0.0
    %1034 = vmatprep.subr.mxu0 0.0
    %1035 = vmatpush1.msra.mxu0 0.0
    %1036 = vmatprep.subr.mxu0 0.0
    %1037 = vmatpush1.msra.mxu0 0.0
    %1038 = vmatprep.subr.mxu0 0.0
    %1039 = vmatpush1.msra.mxu0 0.0
    %1040 = vmatprep.subr.mxu0 0.0
    %1041 = vmatpush1.msra.mxu0 0.0
    %1042 = vmatprep.subr.mxu0 0.0
    %1043 = vmatpush1.msra.mxu0 0.0
    %1044 = vmatprep.subr.mxu0 0.0
    %1045 = vmatpush1.msra.mxu0 0.0
    %1046 = vmatprep.subr.mxu0 0.0
    %1047 = vmatpush1.msra.mxu0 0.0
    %1048 = vmatprep.subr.mxu0 0.0
    %1049 = vmatpush1.msra.mxu0 0.0
    %1050 = vmatprep.subr.mxu0 0.0
    %1051 = vmatpush1.msra.mxu0 0.0
    %1052 = vmatprep.subr.mxu0 0.0
    %1053 = vmatpush1.msra.mxu0 0.0
    %1054 = vmatprep.mubr.f32.mxu0 0.0
    %1055 = vmatmul.mubr.f32.gmra.mrb[0].mxu0 %v972
    %v1056 = vpop.f32.mrb[0].mxu0
    %v1057 = vadd.f32 %v989, %v1056
    %v1058 = vpop.f32.mrb[0].mxu0
    %1059 = vdwg.mxu0
    %1060 = vst [vmem:[#allocation10 + $0x4] sm:$0x1] %v1057
    %s1061 = sld [smem:[#allocation3 + $0x5]]
    %s1062 = scalar_lea.vmem [#allocation4], %s1061
    %v1063 = vld [vmem:[%s1062] sm:$0x1]
    %v1064 = vmax.f32 %v1063, 0.0
    %v1065 = vsel %vm78, %v972, %v1064
    %v1066 = vld [vmem:[#allocation7] sm:$0xff]
    %v1067 = vld [vmem:[#allocation7 + $0x8] sm:$0xff]
    %v1068 = vld [vmem:[#allocation7 + $0x10] sm:$0xff]
    %v1069 = vld [vmem:[#allocation7 + $0x18] sm:$0xff]
    %v1070 = vld [vmem:[#allocation7 + $0x20] sm:$0xff]
    %v1071 = vld [vmem:[#allocation7 + $0x28] sm:$0xff]
    %v1072 = vld [vmem:[#allocation7 + $0x30] sm:$0xff]
    %v1073 = vld [vmem:[#allocation7 + $0x38] sm:$0xff]
    %v1074 = vld [vmem:[#allocation7 + $0x40] sm:$0xff]
    %v1075 = vld [vmem:[#allocation7 + $0x48] sm:$0xff]
    %v1076 = vld [vmem:[#allocation7 + $0x50] sm:$0xff]
    %v1077 = vld [vmem:[#allocation7 + $0x58] sm:$0xff]
    %v1078 = vld [vmem:[#allocation7 + $0x60] sm:$0xff]
    %v1079 = vld [vmem:[#allocation7 + $0x68] sm:$0xff]
    %v1080 = vld [vmem:[#allocation7 + $0x70] sm:$0xff]
    %v1081 = vld [vmem:[#allocation7 + $0x78] sm:$0xff]
    %v1082 = vld [vmem:[%s5] sm:$0x1]
    %1083 = vmatprep.subr.mxu0 0.0
    %1084 = vmatpush1.msra.mxu0 %v1066
    %1085 = vmatprep.subr.mxu0 0.0
    %1086 = vmatpush1.msra.mxu0 %v1067
    %1087 = vmatprep.subr.mxu0 0.0
    %1088 = vmatpush1.msra.mxu0 %v1068
    %1089 = vmatprep.subr.mxu0 0.0
    %1090 = vmatpush1.msra.mxu0 %v1069
    %1091 = vmatprep.subr.mxu0 0.0
    %1092 = vmatpush1.msra.mxu0 %v1070
    %1093 = vmatprep.subr.mxu0 0.0
    %1094 = vmatpush1.msra.mxu0 %v1071
    %1095 = vmatprep.subr.mxu0 0.0
    %1096 = vmatpush1.msra.mxu0 %v1072
    %1097 = vmatprep.subr.mxu0 0.0
    %1098 = vmatpush1.msra.mxu0 %v1073
    %1099 = vmatprep.subr.mxu0 0.0
    %1100 = vmatpush1.msra.mxu0 %v1074
    %1101 = vmatprep.subr.mxu0 0.0
    %1102 = vmatpush1.msra.mxu0 %v1075
    %1103 = vmatprep.subr.mxu0 0.0
    %1104 = vmatpush1.msra.mxu0 %v1076
    %1105 = vmatprep.subr.mxu0 0.0
    %1106 = vmatpush1.msra.mxu0 %v1077
    %1107 = vmatprep.subr.mxu0 0.0
    %1108 = vmatpush1.msra.mxu0 %v1078
    %1109 = vmatprep.subr.mxu0 0.0
    %1110 = vmatpush1.msra.mxu0 %v1079
    %1111 = vmatprep.subr.mxu0 0.0
    %1112 = vmatpush1.msra.mxu0 %v1080
    %1113 = vmatprep.subr.mxu0 0.0
    %1114 = vmatpush1.msra.mxu0 %v1081
    %1115 = vmatprep.subr.mxu0 0.0
    %1116 = vmatpush1.msra.mxu0 0.0
    %1117 = vmatprep.subr.mxu0 0.0
    %1118 = vmatpush1.msra.mxu0 0.0
    %1119 = vmatprep.subr.mxu0 0.0
    %1120 = vmatpush1.msra.mxu0 0.0
    %1121 = vmatprep.subr.mxu0 0.0
    %1122 = vmatpush1.msra.mxu0 0.0
    %1123 = vmatprep.subr.mxu0 0.0
    %1124 = vmatpush1.msra.mxu0 0.0
    %1125 = vmatprep.subr.mxu0 0.0
    %1126 = vmatpush1.msra.mxu0 0.0
    %1127 = vmatprep.subr.mxu0 0.0
    %1128 = vmatpush1.msra.mxu0 0.0
    %1129 = vmatprep.subr.mxu0 0.0
    %1130 = vmatpush1.msra.mxu0 0.0
    %1131 = vmatprep.subr.mxu0 0.0
    %1132 = vmatpush1.msra.mxu0 0.0
    %1133 = vmatprep.subr.mxu0 0.0
    %1134 = vmatpush1.msra.mxu0 0.0
    %1135 = vmatprep.subr.mxu0 0.0
    %1136 = vmatpush1.msra.mxu0 0.0
    %1137 = vmatprep.subr.mxu0 0.0
    %1138 = vmatpush1.msra.mxu0 0.0
    %1139 = vmatprep.subr.mxu0 0.0
    %1140 = vmatpush1.msra.mxu0 0.0
    %1141 = vmatprep.subr.mxu0 0.0
    %1142 = vmatpush1.msra.mxu0 0.0
    %1143 = vmatprep.subr.mxu0 0.0
    %1144 = vmatpush1.msra.mxu0 0.0
    %1145 = vmatprep.subr.mxu0 0.0
    %1146 = vmatpush1.msra.mxu0 0.0
    %1147 = vmatprep.mubr.f32.mxu0 0.0
    %1148 = vmatmul.mubr.f32.gmra.mrb[0].mxu0 %v1065
    %v1149 = vpop.f32.mrb[0].mxu0
    %v1150 = vadd.f32 %v1082, %v1149
    %v1151 = vpop.f32.mrb[0].mxu0
    %1152 = vdwg.mxu0
    %v1153 = vmul.f32 %v1150, 0.5
    %v1154 = vtanh.pop %v1153
    %v1155 = vadd.f32 %v1154, 1.0
    %v1156 = vmul.f32 %v1155, 0.5
    %v1157 = vtanh.pop %v1150
    %1158 = vrot.lane.b32.xlu0 %v1156, 96
    %v1159 = vpop.permute.xlu0 %1158
    %1160 = vrot.lane.b32.xlu0 %v1157, 64
    %v1161 = vpop.permute.xlu0 %1160
    %1162 = vrot.lane.b32.xlu0 %v1156, 32
    %v1163 = vpop.permute.xlu0 %1162
    %v1164 = vmul.f32 %v1159, %v970
    %v1165 = vmul.f32 %v1156, %v1161
    %v1166 = vadd.f32 %v1164, %v1165
    %v1167 = vtanh.pop %v1166
    %v1168 = vmul.f32 %v1163, %v1167
    %v1169 = vld [vmem:[#allocation9] sm:$0xff]
    %v1170 = vld [vmem:[#allocation9 + $0x8] sm:$0xff]
    %v1171 = vld [vmem:[#allocation9 + $0x10] sm:$0xff]
    %v1172 = vld [vmem:[#allocation9 + $0x18] sm:$0xff]
    %v1173 = vld [vmem:[#allocation9 + $0x20] sm:$0xff]
    %v1174 = vld [vmem:[#allocation9 + $0x28] sm:$0xff]
    %v1175 = vld [vmem:[#allocation9 + $0x30] sm:$0xff]
    %v1176 = vld [vmem:[#allocation9 + $0x38] sm:$0xff]
    %v1177 = vld [vmem:[#allocation9 + $0x40] sm:$0xff]
    %v1178 = vld [vmem:[#allocation9 + $0x48] sm:$0xff]
    %v1179 = vld [vmem:[#allocation9 + $0x50] sm:$0xff]
    %v1180 = vld [vmem:[#allocation9 + $0x58] sm:$0xff]
    %v1181 = vld [vmem:[#allocation9 + $0x60] sm:$0xff]
    %v1182 = vld [vmem:[#allocation9 + $0x68] sm:$0xff]
    %v1183 = vld [vmem:[#allocation9 + $0x70] sm:$0xff]
    %v1184 = vld [vmem:[#allocation9 + $0x78] sm:$0xff]
    %v1185 = vld [vmem:[%s7] sm:$0x1]
    %1186 = vmatprep.subr.mxu0 0.0
    %1187 = vmatpush1.msra.mxu0 %v1169
    %1188 = vmatprep.subr.mxu0 0.0
    %1189 = vmatpush1.msra.mxu0 %v1170
    %1190 = vmatprep.subr.mxu0 0.0
    %1191 = vmatpush1.msra.mxu0 %v1171
    %1192 = vmatprep.subr.mxu0 0.0
    %1193 = vmatpush1.msra.mxu0 %v1172
    %1194 = vmatprep.subr.mxu0 0.0
    %1195 = vmatpush1.msra.mxu0 %v1173
    %1196 = vmatprep.subr.mxu0 0.0
    %1197 = vmatpush1.msra.mxu0 %v1174
    %1198 = vmatprep.subr.mxu0 0.0
    %1199 = vmatpush1.msra.mxu0 %v1175
    %1200 = vmatprep.subr.mxu0 0.0
    %1201 = vmatpush1.msra.mxu0 %v1176
    %1202 = vmatprep.subr.mxu0 0.0
    %1203 = vmatpush1.msra.mxu0 %v1177
    %1204 = vmatprep.subr.mxu0 0.0
    %1205 = vmatpush1.msra.mxu0 %v1178
    %1206 = vmatprep.subr.mxu0 0.0
    %1207 = vmatpush1.msra.mxu0 %v1179
    %1208 = vmatprep.subr.mxu0 0.0
    %1209 = vmatpush1.msra.mxu0 %v1180
    %1210 = vmatprep.subr.mxu0 0.0
    %1211 = vmatpush1.msra.mxu0 %v1181
    %1212 = vmatprep.subr.mxu0 0.0
    %1213 = vmatpush1.msra.mxu0 %v1182
    %1214 = vmatprep.subr.mxu0 0.0
    %1215 = vmatpush1.msra.mxu0 %v1183
    %1216 = vmatprep.subr.mxu0 0.0
    %1217 = vmatpush1.msra.mxu0 %v1184
    %1218 = vmatprep.subr.mxu0 0.0
    %1219 = vmatpush1.msra.mxu0 0.0
    %1220 = vmatprep.subr.mxu0 0.0
    %1221 = vmatpush1.msra.mxu0 0.0
    %1222 = vmatprep.subr.mxu0 0.0
    %1223 = vmatpush1.msra.mxu0 0.0
    %1224 = vmatprep.subr.mxu0 0.0
    %1225 = vmatpush1.msra.mxu0 0.0
    %1226 = vmatprep.subr.mxu0 0.0
    %1227 = vmatpush1.msra.mxu0 0.0
    %1228 = vmatprep.subr.mxu0 0.0
    %1229 = vmatpush1.msra.mxu0 0.0
    %1230 = vmatprep.subr.mxu0 0.0
    %1231 = vmatpush1.msra.mxu0 0.0
    %1232 = vmatprep.subr.mxu0 0.0
    %1233 = vmatpush1.msra.mxu0 0.0
    %1234 = vmatprep.subr.mxu0 0.0
    %1235 = vmatpush1.msra.mxu0 0.0
    %1236 = vmatprep.subr.mxu0 0.0
    %1237 = vmatpush1.msra.mxu0 0.0
    %1238 = vmatprep.subr.mxu0 0.0
    %1239 = vmatpush1.msra.mxu0 0.0
    %1240 = vmatprep.subr.mxu0 0.0
    %1241 = vmatpush1.msra.mxu0 0.0
    %1242 = vmatprep.subr.mxu0 0.0
    %1243 = vmatpush1.msra.mxu0 0.0
    %1244 = vmatprep.subr.mxu0 0.0
    %1245 = vmatpush1.msra.mxu0 0.0
    %1246 = vmatprep.subr.mxu0 0.0
    %1247 = vmatpush1.msra.mxu0 0.0
    %1248 = vmatprep.subr.mxu0 0.0
    %1249 = vmatpush1.msra.mxu0 0.0
    %1250 = vmatprep.mubr.f32.mxu0 0.0
    %1251 = vmatmul.mubr.f32.gmra.mrb[0].mxu0 %v1168
    %v1252 = vpop.f32.mrb[0].mxu0
    %v1253 = vadd.f32 %v1185, %v1252
    %v1254 = vpop.f32.mrb[0].mxu0
    %1255 = vdwg.mxu0
    %1256 = vst [vmem:[#allocation10 + $0x5] sm:$0x1] %v1253
    %s1257 = sld [smem:[#allocation3 + $0x6]]
    %s1258 = scalar_lea.vmem [#allocation4], %s1257
    %v1259 = vld [vmem:[%s1258] sm:$0x1]
    %v1260 = vmax.f32 %v1259, 0.0
    %v1261 = vsel %vm78, %v1168, %v1260
    %v1262 = vld [vmem:[#allocation7] sm:$0xff]
    %v1263 = vld [vmem:[#allocation7 + $0x8] sm:$0xff]
    %v1264 = vld [vmem:[#allocation7 + $0x10] sm:$0xff]
    %v1265 = vld [vmem:[#allocation7 + $0x18] sm:$0xff]
    %v1266 = vld [vmem:[#allocation7 + $0x20] sm:$0xff]
    %v1267 = vld [vmem:[#allocation7 + $0x28] sm:$0xff]
    %v1268 = vld [vmem:[#allocation7 + $0x30] sm:$0xff]
    %v1269 = vld [vmem:[#allocation7 + $0x38] sm:$0xff]
    %v1270 = vld [vmem:[#allocation7 + $0x40] sm:$0xff]
    %v1271 = vld [vmem:[#allocation7 + $0x48] sm:$0xff]
    %v1272 = vld [vmem:[#allocation7 + $0x50] sm:$0xff]
    %v1273 = vld [vmem:[#allocation7 + $0x58] sm:$0xff]
    %v1274 = vld [vmem:[#allocation7 + $0x60] sm:$0xff]
    %v1275 = vld [vmem:[#allocation7 + $0x68] sm:$0xff]
    %v1276 = vld [vmem:[#allocation7 + $0x70] sm:$0xff]
    %v1277 = vld [vmem:[#allocation7 + $0x78] sm:$0xff]
    %v1278 = vld [vmem:[%s5] sm:$0x1]
    %1279 = vmatprep.subr.mxu0 0.0
    %1280 = vmatpush1.msra.mxu0 %v1262
    %1281 = vmatprep.subr.mxu0 0.0
    %1282 = vmatpush1.msra.mxu0 %v1263
    %1283 = vmatprep.subr.mxu0 0.0
    %1284 = vmatpush1.msra.mxu0 %v1264
    %1285 = vmatprep.subr.mxu0 0.0
    %1286 = vmatpush1.msra.mxu0 %v1265
    %1287 = vmatprep.subr.mxu0 0.0
    %1288 = vmatpush1.msra.mxu0 %v1266
    %1289 = vmatprep.subr.mxu0 0.0
    %1290 = vmatpush1.msra.mxu0 %v1267
    %1291 = vmatprep.subr.mxu0 0.0
    %1292 = vmatpush1.msra.mxu0 %v1268
    %1293 = vmatprep.subr.mxu0 0.0
    %1294 = vmatpush1.msra.mxu0 %v1269
    %1295 = vmatprep.subr.mxu0 0.0
    %1296 = vmatpush1.msra.mxu0 %v1270
    %1297 = vmatprep.subr.mxu0 0.0
    %1298 = vmatpush1.msra.mxu0 %v1271
    %1299 = vmatprep.subr.mxu0 0.0
    %1300 = vmatpush1.msra.mxu0 %v1272
    %1301 = vmatprep.subr.mxu0 0.0
    %1302 = vmatpush1.msra.mxu0 %v1273
    %1303 = vmatprep.subr.mxu0 0.0
    %1304 = vmatpush1.msra.mxu0 %v1274
    %1305 = vmatprep.subr.mxu0 0.0
    %1306 = vmatpush1.msra.mxu0 %v1275
    %1307 = vmatprep.subr.mxu0 0.0
    %1308 = vmatpush1.msra.mxu0 %v1276
    %1309 = vmatprep.subr.mxu0 0.0
    %1310 = vmatpush1.msra.mxu0 %v1277
    %1311 = vmatprep.subr.mxu0 0.0
    %1312 = vmatpush1.msra.mxu0 0.0
    %1313 = vmatprep.subr.mxu0 0.0
    %1314 = vmatpush1.msra.mxu0 0.0
    %1315 = vmatprep.subr.mxu0 0.0
    %1316 = vmatpush1.msra.mxu0 0.0
    %1317 = vmatprep.subr.mxu0 0.0
    %1318 = vmatpush1.msra.mxu0 0.0
    %1319 = vmatprep.subr.mxu0 0.0
    %1320 = vmatpush1.msra.mxu0 0.0
    %1321 = vmatprep.subr.mxu0 0.0
    %1322 = vmatpush1.msra.mxu0 0.0
    %1323 = vmatprep.subr.mxu0 0.0
    %1324 = vmatpush1.msra.mxu0 0.0
    %1325 = vmatprep.subr.mxu0 0.0
    %1326 = vmatpush1.msra.mxu0 0.0
    %1327 = vmatprep.subr.mxu0 0.0
    %1328 = vmatpush1.msra.mxu0 0.0
    %1329 = vmatprep.subr.mxu0 0.0
    %1330 = vmatpush1.msra.mxu0 0.0
    %1331 = vmatprep.subr.mxu0 0.0
    %1332 = vmatpush1.msra.mxu0 0.0
    %1333 = vmatprep.subr.mxu0 0.0
    %1334 = vmatpush1.msra.mxu0 0.0
    %1335 = vmatprep.subr.mxu0 0.0
    %1336 = vmatpush1.msra.mxu0 0.0
    %1337 = vmatprep.subr.mxu0 0.0
    %1338 = vmatpush1.msra.mxu0 0.0
    %1339 = vmatprep.subr.mxu0 0.0
    %1340 = vmatpush1.msra.mxu0 0.0
    %1341 = vmatprep.subr.mxu0 0.0
    %1342 = vmatpush1.msra.mxu0 0.0
    %1343 = vmatprep.mubr.f32.mxu0 0.0
    %1344 = vmatmul.mubr.f32.gmra.mrb[0].mxu0 %v1261
    %v1345 = vpop.f32.mrb[0].mxu0
    %v1346 = vadd.f32 %v1278, %v1345
    %v1347 = vpop.f32.mrb[0].mxu0
    %1348 = vdwg.mxu0
    %v1349 = vmul.f32 %v1346, 0.5
    %v1350 = vtanh.pop %v1349
    %v1351 = vadd.f32 %v1350, 1.0
    %v1352 = vmul.f32 %v1351, 0.5
    %v1353 = vtanh.pop %v1346
    %1354 = vrot.lane.b32.xlu0 %v1352, 96
    %v1355 = vpop.permute.xlu0 %1354
    %1356 = vrot.lane.b32.xlu0 %v1353, 64
    %v1357 = vpop.permute.xlu0 %1356
    %1358 = vrot.lane.b32.xlu0 %v1352, 32
    %v1359 = vpop.permute.xlu0 %1358
    %v1360 = vmul.f32 %v1355, %v1166
    %v1361 = vmul.f32 %v1352, %v1357
    %v1362 = vadd.f32 %v1360, %v1361
    %v1363 = vtanh.pop %v1362
    %v1364 = vmul.f32 %v1359, %v1363
    %v1365 = vld [vmem:[#allocation9] sm:$0xff]
    %v1366 = vld [vmem:[#allocation9 + $0x8] sm:$0xff]
    %v1367 = vld [vmem:[#allocation9 + $0x10] sm:$0xff]
    %v1368 = vld [vmem:[#allocation9 + $0x18] sm:$0xff]
    %v1369 = vld [vmem:[#allocation9 + $0x20] sm:$0xff]
    %v1370 = vld [vmem:[#allocation9 + $0x28] sm:$0xff]
    %v1371 = vld [vmem:[#allocation9 + $0x30] sm:$0xff]
    %v1372 = vld [vmem:[#allocation9 + $0x38] sm:$0xff]
    %v1373 = vld [vmem:[#allocation9 + $0x40] sm:$0xff]
    %v1374 = vld [vmem:[#allocation9 + $0x48] sm:$0xff]
    %v1375 = vld [vmem:[#allocation9 + $0x50] sm:$0xff]
    %v1376 = vld [vmem:[#allocation9 + $0x58] sm:$0xff]
    %v1377 = vld [vmem:[#allocation9 + $0x60] sm:$0xff]
    %v1378 = vld [vmem:[#allocation9 + $0x68] sm:$0xff]
    %v1379 = vld [vmem:[#allocation9 + $0x70] sm:$0xff]
    %v1380 = vld [vmem:[#allocation9 + $0x78] sm:$0xff]
    %v1381 = vld [vmem:[%s7] sm:$0x1]
    %1382 = vmatprep.subr.mxu0 0.0
    %1383 = vmatpush1.msra.mxu0 %v1365
    %1384 = vmatprep.subr.mxu0 0.0
    %1385 = vmatpush1.msra.mxu0 %v1366
    %1386 = vmatprep.subr.mxu0 0.0
    %1387 = vmatpush1.msra.mxu0 %v1367
    %1388 = vmatprep.subr.mxu0 0.0
    %1389 = vmatpush1.msra.mxu0 %v1368
    %1390 = vmatprep.subr.mxu0 0.0
    %1391 = vmatpush1.msra.mxu0 %v1369
    %1392 = vmatprep.subr.mxu0 0.0
    %1393 = vmatpush1.msra.mxu0 %v1370
    %1394 = vmatprep.subr.mxu0 0.0
    %1395 = vmatpush1.msra.mxu0 %v1371
    %1396 = vmatprep.subr.mxu0 0.0
    %1397 = vmatpush1.msra.mxu0 %v1372
    %1398 = vmatprep.subr.mxu0 0.0
    %1399 = vmatpush1.msra.mxu0 %v1373
    %1400 = vmatprep.subr.mxu0 0.0
    %1401 = vmatpush1.msra.mxu0 %v1374
    %1402 = vmatprep.subr.mxu0 0.0
    %1403 = vmatpush1.msra.mxu0 %v1375
    %1404 = vmatprep.subr.mxu0 0.0
    %1405 = vmatpush1.msra.mxu0 %v1376
    %1406 = vmatprep.subr.mxu0 0.0
    %1407 = vmatpush1.msra.mxu0 %v1377
    %1408 = vmatprep.subr.mxu0 0.0
    %1409 = vmatpush1.msra.mxu0 %v1378
    %1410 = vmatprep.subr.mxu0 0.0
    %1411 = vmatpush1.msra.mxu0 %v1379
    %1412 = vmatprep.subr.mxu0 0.0
    %1413 = vmatpush1.msra.mxu0 %v1380
    %1414 = vmatprep.subr.mxu0 0.0
    %1415 = vmatpush1.msra.mxu0 0.0
    %1416 = vmatprep.subr.mxu0 0.0
    %1417 = vmatpush1.msra.mxu0 0.0
    %1418 = vmatprep.subr.mxu0 0.0
    %1419 = vmatpush1.msra.mxu0 0.0
    %1420 = vmatprep.subr.mxu0 0.0
    %1421 = vmatpush1.msra.mxu0 0.0
    %1422 = vmatprep.subr.mxu0 0.0
    %1423 = vmatpush1.msra.mxu0 0.0
    %1424 = vmatprep.subr.mxu0 0.0
    %1425 = vmatpush1.msra.mxu0 0.0
    %1426 = vmatprep.subr.mxu0 0.0
    %1427 = vmatpush1.msra.mxu0 0.0
    %1428 = vmatprep.subr.mxu0 0.0
    %1429 = vmatpush1.msra.mxu0 0.0
    %1430 = vmatprep.subr.mxu0 0.0
    %1431 = vmatpush1.msra.mxu0 0.0
    %1432 = vmatprep.subr.mxu0 0.0
    %1433 = vmatpush1.msra.mxu0 0.0
    %1434 = vmatprep.subr.mxu0 0.0
    %1435 = vmatpush1.msra.mxu0 0.0
    %1436 = vmatprep.subr.mxu0 0.0
    %1437 = vmatpush1.msra.mxu0 0.0
    %1438 = vmatprep.subr.mxu0 0.0
    %1439 = vmatpush1.msra.mxu0 0.0
    %1440 = vmatprep.subr.mxu0 0.0
    %1441 = vmatpush1.msra.mxu0 0.0
    %1442 = vmatprep.subr.mxu0 0.0
    %1443 = vmatpush1.msra.mxu0 0.0
    %1444 = vmatprep.subr.mxu0 0.0
    %1445 = vmatpush1.msra.mxu0 0.0
    %1446 = vmatprep.mubr.f32.mxu0 0.0
    %1447 = vmatmul.mubr.f32.gmra.mrb[0].mxu0 %v1364
    %v1448 = vpop.f32.mrb[0].mxu0
    %v1449 = vadd.f32 %v1381, %v1448
    %v1450 = vpop.f32.mrb[0].mxu0
    %1451 = vdwg.mxu0
    %1452 = vst [vmem:[#allocation10 + $0x6] sm:$0x1] %v1449
    %s1453 = sld [smem:[#allocation3 + $0x7]]
    %s1454 = scalar_lea.vmem [#allocation4], %s1453
    %v1455 = vld [vmem:[%s1454] sm:$0x1]
    %v1456 = vmax.f32 %v1455, 0.0
    %v1457 = vsel %vm78, %v1364, %v1456
    %v1458 = vld [vmem:[#allocation7] sm:$0xff]
    %v1459 = vld [vmem:[#allocation7 + $0x8] sm:$0xff]
    %v1460 = vld [vmem:[#allocation7 + $0x10] sm:$0xff]
    %v1461 = vld [vmem:[#allocation7 + $0x18] sm:$0xff]
    %v1462 = vld [vmem:[#allocation7 + $0x20] sm:$0xff]
    %v1463 = vld [vmem:[#allocation7 + $0x28] sm:$0xff]
    %v1464 = vld [vmem:[#allocation7 + $0x30] sm:$0xff]
    %v1465 = vld [vmem:[#allocation7 + $0x38] sm:$0xff]
    %v1466 = vld [vmem:[#allocation7 + $0x40] sm:$0xff]
    %v1467 = vld [vmem:[#allocation7 + $0x48] sm:$0xff]
    %v1468 = vld [vmem:[#allocation7 + $0x50] sm:$0xff]
    %v1469 = vld [vmem:[#allocation7 + $0x58] sm:$0xff]
    %v1470 = vld [vmem:[#allocation7 + $0x60] sm:$0xff]
    %v1471 = vld [vmem:[#allocation7 + $0x68] sm:$0xff]
    %v1472 = vld [vmem:[#allocation7 + $0x70] sm:$0xff]
    %v1473 = vld [vmem:[#allocation7 + $0x78] sm:$0xff]
    %v1474 = vld [vmem:[%s5] sm:$0x1]
    %1475 = vmatprep.subr.mxu0 0.0
    %1476 = vmatpush1.msra.mxu0 %v1458
    %1477 = vmatprep.subr.mxu0 0.0
    %1478 = vmatpush1.msra.mxu0 %v1459
    %1479 = vmatprep.subr.mxu0 0.0
    %1480 = vmatpush1.msra.mxu0 %v1460
    %1481 = vmatprep.subr.mxu0 0.0
    %1482 = vmatpush1.msra.mxu0 %v1461
    %1483 = vmatprep.subr.mxu0 0.0
    %1484 = vmatpush1.msra.mxu0 %v1462
    %1485 = vmatprep.subr.mxu0 0.0
    %1486 = vmatpush1.msra.mxu0 %v1463
    %1487 = vmatprep.subr.mxu0 0.0
    %1488 = vmatpush1.msra.mxu0 %v1464
    %1489 = vmatprep.subr.mxu0 0.0
    %1490 = vmatpush1.msra.mxu0 %v1465
    %1491 = vmatprep.subr.mxu0 0.0
    %1492 = vmatpush1.msra.mxu0 %v1466
    %1493 = vmatprep.subr.mxu0 0.0
    %1494 = vmatpush1.msra.mxu0 %v1467
    %1495 = vmatprep.subr.mxu0 0.0
    %1496 = vmatpush1.msra.mxu0 %v1468
    %1497 = vmatprep.subr.mxu0 0.0
    %1498 = vmatpush1.msra.mxu0 %v1469
    %1499 = vmatprep.subr.mxu0 0.0
    %1500 = vmatpush1.msra.mxu0 %v1470
    %1501 = vmatprep.subr.mxu0 0.0
    %1502 = vmatpush1.msra.mxu0 %v1471
    %1503 = vmatprep.subr.mxu0 0.0
    %1504 = vmatpush1.msra.mxu0 %v1472
    %1505 = vmatprep.subr.mxu0 0.0
    %1506 = vmatpush1.msra.mxu0 %v1473
    %1507 = vmatprep.subr.mxu0 0.0
    %1508 = vmatpush1.msra.mxu0 0.0
    %1509 = vmatprep.subr.mxu0 0.0
    %1510 = vmatpush1.msra.mxu0 0.0
    %1511 = vmatprep.subr.mxu0 0.0
    %1512 = vmatpush1.msra.mxu0 0.0
    %1513 = vmatprep.subr.mxu0 0.0
    %1514 = vmatpush1.msra.mxu0 0.0
    %1515 = vmatprep.subr.mxu0 0.0
    %1516 = vmatpush1.msra.mxu0 0.0
    %1517 = vmatprep.subr.mxu0 0.0
    %1518 = vmatpush1.msra.mxu0 0.0
    %1519 = vmatprep.subr.mxu0 0.0
    %1520 = vmatpush1.msra.mxu0 0.0
    %1521 = vmatprep.subr.mxu0 0.0
    %1522 = vmatpush1.msra.mxu0 0.0
    %1523 = vmatprep.subr.mxu0 0.0
    %1524 = vmatpush1.msra.mxu0 0.0
    %1525 = vmatprep.subr.mxu0 0.0
    %1526 = vmatpush1.msra.mxu0 0.0
    %1527 = vmatprep.subr.mxu0 0.0
    %1528 = vmatpush1.msra.mxu0 0.0
    %1529 = vmatprep.subr.mxu0 0.0
    %1530 = vmatpush1.msra.mxu0 0.0
    %1531 = vmatprep.subr.mxu0 0.0
    %1532 = vmatpush1.msra.mxu0 0.0
    %1533 = vmatprep.subr.mxu0 0.0
    %1534 = vmatpush1.msra.mxu0 0.0
    %1535 = vmatprep.subr.mxu0 0.0
    %1536 = vmatpush1.msra.mxu0 0.0
    %1537 = vmatprep.subr.mxu0 0.0
    %1538 = vmatpush1.msra.mxu0 0.0
    %1539 = vmatprep.mubr.f32.mxu0 0.0
    %1540 = vmatmul.mubr.f32.gmra.mrb[0].mxu0 %v1457
    %v1541 = vpop.f32.mrb[0].mxu0
    %v1542 = vadd.f32 %v1474, %v1541
    %v1543 = vpop.f32.mrb[0].mxu0
    %1544 = vdwg.mxu0
    %v1545 = vmul.f32 %v1542, 0.5
    %v1546 = vtanh.pop %v1545
    %v1547 = vadd.f32 %v1546, 1.0
    %v1548 = vmul.f32 %v1547, 0.5
    %v1549 = vtanh.pop %v1542
    %1550 = vrot.lane.b32.xlu0 %v1548, 96
    %v1551 = vpop.permute.xlu0 %1550
    %1552 = vrot.lane.b32.xlu0 %v1549, 64
    %v1553 = vpop.permute.xlu0 %1552
    %1554 = vrot.lane.b32.xlu0 %v1548, 32
    %v1555 = vpop.permute.xlu0 %1554
    %v1556 = vmul.f32 %v1551, %v1362
    %v1557 = vmul.f32 %v1548, %v1553
    %v1558 = vadd.f32 %v1556, %v1557
    %v1559 = vtanh.pop %v1558
    %v1560 = vmul.f32 %v1555, %v1559
    %v1561 = vld [vmem:[#allocation9] sm:$0xff]
    %v1562 = vld [vmem:[#allocation9 + $0x8] sm:$0xff]
    %v1563 = vld [vmem:[#allocation9 + $0x10] sm:$0xff]
    %v1564 = vld [vmem:[#allocation9 + $0x18] sm:$0xff]
    %v1565 = vld [vmem:[#allocation9 + $0x20] sm:$0xff]
    %v1566 = vld [vmem:[#allocation9 + $0x28] sm:$0xff]
    %v1567 = vld [vmem:[#allocation9 + $0x30] sm:$0xff]
    %v1568 = vld [vmem:[#allocation9 + $0x38] sm:$0xff]
    %v1569 = vld [vmem:[#allocation9 + $0x40] sm:$0xff]
    %v1570 = vld [vmem:[#allocation9 + $0x48] sm:$0xff]
    %v1571 = vld [vmem:[#allocation9 + $0x50] sm:$0xff]
    %v1572 = vld [vmem:[#allocation9 + $0x58] sm:$0xff]
    %v1573 = vld [vmem:[#allocation9 + $0x60] sm:$0xff]
    %v1574 = vld [vmem:[#allocation9 + $0x68] sm:$0xff]
    %v1575 = vld [vmem:[#allocation9 + $0x70] sm:$0xff]
    %v1576 = vld [vmem:[#allocation9 + $0x78] sm:$0xff]
    %v1577 = vld [vmem:[%s7] sm:$0x1]
    %1578 = vmatprep.subr.mxu0 0.0
    %1579 = vmatpush1.msra.mxu0 %v1561
    %1580 = vmatprep.subr.mxu0 0.0
    %1581 = vmatpush1.msra.mxu0 %v1562
    %1582 = vmatprep.subr.mxu0 0.0
    %1583 = vmatpush1.msra.mxu0 %v1563
    %1584 = vmatprep.subr.mxu0 0.0
    %1585 = vmatpush1.msra.mxu0 %v1564
    %1586 = vmatprep.subr.mxu0 0.0
    %1587 = vmatpush1.msra.mxu0 %v1565
    %1588 = vmatprep.subr.mxu0 0.0
    %1589 = vmatpush1.msra.mxu0 %v1566
    %1590 = vmatprep.subr.mxu0 0.0
    %1591 = vmatpush1.msra.mxu0 %v1567
    %1592 = vmatprep.subr.mxu0 0.0
    %1593 = vmatpush1.msra.mxu0 %v1568
    %1594 = vmatprep.subr.mxu0 0.0
    %1595 = vmatpush1.msra.mxu0 %v1569
    %1596 = vmatprep.subr.mxu0 0.0
    %1597 = vmatpush1.msra.mxu0 %v1570
    %1598 = vmatprep.subr.mxu0 0.0
    %1599 = vmatpush1.msra.mxu0 %v1571
    %1600 = vmatprep.subr.mxu0 0.0
    %1601 = vmatpush1.msra.mxu0 %v1572
    %1602 = vmatprep.subr.mxu0 0.0
    %1603 = vmatpush1.msra.mxu0 %v1573
    %1604 = vmatprep.subr.mxu0 0.0
    %1605 = vmatpush1.msra.mxu0 %v1574
    %1606 = vmatprep.subr.mxu0 0.0
    %1607 = vmatpush1.msra.mxu0 %v1575
    %1608 = vmatprep.subr.mxu0 0.0
    %1609 = vmatpush1.msra.mxu0 %v1576
    %1610 = vmatprep.subr.mxu0 0.0
    %1611 = vmatpush1.msra.mxu0 0.0
    %1612 = vmatprep.subr.mxu0 0.0
    %1613 = vmatpush1.msra.mxu0 0.0
    %1614 = vmatprep.subr.mxu0 0.0
    %1615 = vmatpush1.msra.mxu0 0.0
    %1616 = vmatprep.subr.mxu0 0.0
    %1617 = vmatpush1.msra.mxu0 0.0
    %1618 = vmatprep.subr.mxu0 0.0
    %1619 = vmatpush1.msra.mxu0 0.0
    %1620 = vmatprep.subr.mxu0 0.0
    %1621 = vmatpush1.msra.mxu0 0.0
    %1622 = vmatprep.subr.mxu0 0.0
    %1623 = vmatpush1.msra.mxu0 0.0
    %1624 = vmatprep.subr.mxu0 0.0
    %1625 = vmatpush1.msra.mxu0 0.0
    %1626 = vmatprep.subr.mxu0 0.0
    %1627 = vmatpush1.msra.mxu0 0.0
    %1628 = vmatprep.subr.mxu0 0.0
    %1629 = vmatpush1.msra.mxu0 0.0
    %1630 = vmatprep.subr.mxu0 0.0
    %1631 = vmatpush1.msra.mxu0 0.0
    %1632 = vmatprep.subr.mxu0 0.0
    %1633 = vmatpush1.msra.mxu0 0.0
    %1634 = vmatprep.subr.mxu0 0.0
    %1635 = vmatpush1.msra.mxu0 0.0
    %1636 = vmatprep.subr.mxu0 0.0
    %1637 = vmatpush1.msra.mxu0 0.0
    %1638 = vmatprep.subr.mxu0 0.0
    %1639 = vmatpush1.msra.mxu0 0.0
    %1640 = vmatprep.subr.mxu0 0.0
    %1641 = vmatpush1.msra.mxu0 0.0
    %1642 = vmatprep.mubr.f32.mxu0 0.0
    %1643 = vmatmul.mubr.f32.gmra.mrb[0].mxu0 %v1560
    %v1644 = vpop.f32.mrb[0].mxu0
    %v1645 = vadd.f32 %v1577, %v1644
    %v1646 = vpop.f32.mrb[0].mxu0
    %1647 = vdwg.mxu0
    %1648 = vst [vmem:[#allocation10 + $0x7] sm:$0x1] %v1645
    %v1649 = vsel %vm78, %v1560, 0.0
    %1650 = vst [vmem:[#allocation11] sm:$0x1] %v1649
    %v1651 = vsel %vm78, %v1558, 0.0
    %1652 = vst [vmem:[#allocation11 + $0x1] sm:$0x1] %v1651
    // Predicated region
    $region42: #{tpu_custom_call.1} parent=1 // pred_check
      _
    $region43: #{tpu_custom_call.1} parent=1 // pred_check_branch
      %1654 = sbr.rel (0) target = $region45
    $region44: #{tpu_custom_call.1} parent=1 // pred_region
      %s1656 = ssub.s32 128, 128
      %1657 = vsyncadd [#allocation6], %s1656
      %s1659 = sshll.u32 [#allocation10], 4
      %s1660 = int_to_ptr.vmem [resolvable:$true] %s1659
      %1662 = dma.vmem_to_hbm [thread:$0]  %s1660, 128, %s8, [#allocation6]
    $region45: #{tpu_custom_call.1} parent=1 // pred_fallthru
      _
    // Predicated region
    $region46: #{tpu_custom_call.1} parent=1 // pred_check
      _
    $region47: #{tpu_custom_call.1} parent=1 // pred_check_branch
      %1664 = sbr.rel (0) target = $region49
    $region48: #{tpu_custom_call.1} parent=1 // pred_region
      %s1666 = ssub.s32 32, 32
      %1667 = vsyncadd [#allocation12], %s1666
      %s1669 = sshll.u32 [#allocation11], 4
      %s1670 = int_to_ptr.vmem [resolvable:$true] %s1669
      %1672 = dma.vmem_to_hbm [thread:$0]  %s1670, 32, %s9, [#allocation12]
    $region49: #{tpu_custom_call.1} parent=1 // pred_fallthru
      _
    // Predicated region
    $region50: #{tpu_custom_call.1} parent=1 // pred_check
      _
    $region51: #{tpu_custom_call.1} parent=1 // pred_check_branch
      %1674 = sbr.rel (0) target = $region53
    $region52: #{tpu_custom_call.1} parent=1 // pred_region
      %1675 = dma.done [#allocation6], 128
    $region53: #{tpu_custom_call.1} parent=1 // pred_fallthru
      _
    // Predicated region
    $region54: #{tpu_custom_call.1} parent=1 // pred_check
      _
    $region55: #{tpu_custom_call.1} parent=1 // pred_check_branch
      %1677 = sbr.rel (0) target = $region57
    $region56: #{tpu_custom_call.1} parent=1 // pred_region
      %1678 = dma.done [#allocation12], 32
    $region57: #{tpu_custom_call.1} parent=1 // pred_fallthru
      _
    %1679 = vsyncpa [#allocation5], 1
    %1680 = vsyncpa [#allocation8], 1
    %1681 = vsyncpa [#allocation6], 1
    %1682 = vsyncpa [#allocation12], 1

</llo_original>
